<compile_context>
chip_gen: v7x
topology: tpu7x:2x2x1
jax: 0.10.0
libtpu: 0.0.40
codegen_flags: <defaults>
</compile_context>

<pallas_src>
import jax
import jax.numpy as jnp
from jax import lax
from jax.experimental import pallas as pl
from jax.experimental.pallas import tpu as pltpu


# ----------------------------------------------------------------------------
# Glue: sampling & grouping (plain JAX, mirrors the PyTorch reference)
# ----------------------------------------------------------------------------
# TODO(synk): FPS / ball-query / gathers are data-dependent sort+gather glue
# with no clean rectangular-tile Pallas mapping; kept in plain JAX.
def get_dists(points1, points2):
    """points1 (B,M,C), points2 (B,N,C) -> (B,M,N) euclidean distances."""
    d = (jnp.sum(points1 ** 2, axis=-1)[:, :, None]
         + jnp.sum(points2 ** 2, axis=-1)[:, None, :]
         - 2.0 * jnp.einsum("bmc,bnc->bmn", points1, points2))
    d = jnp.where(d < 0, 1e-7, d)
    return jnp.sqrt(d).astype(jnp.float32)


def fps(xyz, M, key):
    """Farthest point sampling. xyz (B,N,3) -> (B,M) int32 indices."""
    B, N, _ = xyz.shape
    inds0 = jax.random.randint(key, (B,), 0, N, dtype=jnp.int32)
    batch = jnp.arange(B)

    def body(i, carry):
        centroids, dists, inds = carry
        centroids = centroids.at[:, i].set(inds)
        cur = xyz[batch, inds]                                  # (B,3)
        cur_d = get_dists(cur[:, None, :], xyz)[:, 0, :]        # (B,N)
        dists = jnp.where(cur_d < dists, cur_d, dists)
        inds = jnp.argmax(dists, axis=1).astype(jnp.int32)
        return centroids, dists, inds

    centroids = jnp.zeros((B, M), jnp.int32)
    dists = jnp.full((B, N), 1e5, jnp.float32)
    centroids, _, _ = lax.fori_loop(0, M, body, (centroids, dists, inds0))
    return centroids


def ball_query(xyz, new_xyz, radius, K):
    """xyz (B,N,3), new_xyz (B,M,3) -> (B,M,K) int32 indices."""
    B, N, _ = xyz.shape
    dists = get_dists(new_xyz, xyz)                              # (B,M,N)
    arange = jnp.arange(N, dtype=jnp.int32)[None, None, :]
    inds = jnp.where(dists > radius, N, arange)
    inds = jnp.sort(inds, axis=-1)[:, :, :K]
    first = inds[:, :, 0:1]
    inds = jnp.where(inds == N, first, inds)
    return inds


def gather_points(points, inds):
    """points (B,N,C), inds (B,M) or (B,M,K) -> gathered points."""
    B = points.shape[0]
    batch = jnp.arange(B).reshape((B,) + (1,) * (inds.ndim - 1))
    return points[batch, inds]


def sample_and_group(xyz, points, M, radius, K, key, use_xyz=True,
                     feat_dtype=jnp.float32):
    new_xyz = gather_points(xyz, fps(xyz, M, key))               # (B,M,3)
    grouped_inds = ball_query(xyz, new_xyz, radius, K)           # (B,M,K)
    grouped_xyz = gather_points(xyz, grouped_inds)               # (B,M,K,3)
    grouped_xyz = grouped_xyz - new_xyz[:, :, None, :]
    if points is not None:
        grouped_points = gather_points(points, grouped_inds)    # (B,M,K,C)
        if use_xyz:
            # Cast at the concat so the largest tensor is written once in the
            # kernel's input dtype (avoids a separate full-size f32 pass).
            new_points = jnp.concatenate(
                [grouped_xyz.astype(feat_dtype),
                 grouped_points.astype(feat_dtype)], axis=-1)
        else:
            new_points = grouped_points.astype(feat_dtype)
    else:
        new_points = grouped_xyz.astype(feat_dtype)
    return new_xyz, new_points, grouped_inds, grouped_xyz


def sample_and_group_all(xyz, points, use_xyz=True, feat_dtype=jnp.float32):
    B, M, C = xyz.shape
    new_xyz = jnp.zeros((B, 1, C), xyz.dtype)
    grouped_inds = jnp.tile(jnp.arange(M, dtype=jnp.int32)[None, None, :], (B, 1, 1))
    grouped_xyz = xyz.reshape(B, 1, M, C)
    if points is not None:
        if use_xyz:
            new_points = jnp.concatenate(
                [xyz.astype(feat_dtype), points.astype(feat_dtype)], axis=2)
        else:
            new_points = points.astype(feat_dtype)
        new_points = new_points[:, None]                         # (B,1,M,C[+3])
    else:
        new_points = grouped_xyz.astype(feat_dtype)
    return new_xyz, new_points, grouped_inds, grouped_xyz


# ----------------------------------------------------------------------------
# Hardware-aware helpers
# ----------------------------------------------------------------------------
def _round_up(x, m):
    return ((x + m - 1) // m) * m


def _tpu_vmem_budget_and_limit():
    """Generation-aware (tile budget, scoped-vmem limit) in bytes."""
    phys = None
    try:
        info = pltpu.get_tpu_info()
        phys = int(getattr(info, "vmem_capacity_bytes", 0)) or None
    except Exception:
        phys = None
    if not phys:
        phys = 64 * 1024 * 1024                    # conservative: v7x per-TC VMEM
    budget = min(phys // 2, 64 * 1024 * 1024)      # tile-sizing budget
    limit = min((phys * 3) // 4, 96 * 1024 * 1024)  # Mosaic scoped-vmem limit
    return budget, limit


def _num_tensorcores():
    """Best-effort count of TensorCores the 'parallel' grid axis can use."""
    try:
        kind = (jax.devices()[0].device_kind or "").lower()
    except Exception:
        return 1
    if ("v7" in kind) or ("v4" in kind) or ("v5p" in kind):
        return 2
    return 1


# ----------------------------------------------------------------------------
# Pallas kernel: shared MLP (1x1 conv, BN folded into W, ReLU) -> pool over K
# ----------------------------------------------------------------------------
def _make_mlp_pool_kernel(num_layers, pooling, k_real, tk):
    """Kernel over grid (group tile g [parallel], k chunk [arbitrary]).

    Input block x_ref: (tk, Cin, tg) bf16 — groups on lanes, channels on
    sublanes.  Output block out_ref: (Cout_pad, tg) f32, block index constant
    along k, so it acts as the pooling accumulator (no scratch needed).
    """
    pad_start = k_real % tk   # first j that can be padding (0 => no padding)

    def kernel(x_ref, *refs):
        params = refs[:2 * num_layers]               # (w_t, b) per layer
        out_ref = refs[2 * num_layers]
        k_idx = pl.program_id(1)
        tk_ = x_ref.shape[0]

        local = None
        for j in range(tk_):                         # short static unrolled loop
            x = x_ref[j]                             # (Cin, tg) bf16, lane-dense
            y = None
            for li in range(num_layers):
                w = params[2 * li][...]              # (Cout, Cin) bf16, BN folded
                b = params[2 * li + 1][...]          # (Cout, 1)   f32
                y = jnp.dot(w, x, preferred_element_type=jnp.float32)
                y = jnp.maximum(y + b, 0.0)          # f32 bias + ReLU epilogue
                if li + 1 < num_layers:
                    x = y.astype(jnp.bfloat16)       # bf16 between layers
            # Neutralize padded-K rows only for the (static) j positions that
            # can be padding; the scalar select only matters in the last chunk.
            if pad_start and j >= pad_start:
                valid = (k_idx * tk + j) < k_real
                y = jnp.where(valid, y, 0.0 if pooling == "avg" else -jnp.inf)
            if local is None:
                local = y
            elif pooling == "avg":
                local = local + y
            else:
                local = jnp.maximum(local, y)

        @pl.when(k_idx == 0)
        def _():
            out_ref[...] = local

        @pl.when(k_idx > 0)
        def _():
            if pooling == "avg":
                out_ref[...] = out_ref[...] + local
            else:
                out_ref[...] = jnp.maximum(out_ref[...], local)

        if pooling == "avg":
            @pl.when(k_idx == pl.num_programs(1) - 1)
            def _():
                out_ref[...] = out_ref[...] * (1.0 / k_real)

    return kernel


def mlp_and_pool(new_points, weights_t, biases, pooling="max", target_tg=4096):
    """new_points (B, M, K, Cin) -> pooled features (B, M, Cout_pad) f32.

    weights_t[i] is bf16 (Cout_i, Cin_i) with the BN scale already folded in;
    biases[i] is f32 (Cout_i, 1).  The last layer's Cout is sublane-padded
    (multiple of 8) with zero rows; the caller slices the real channels.
    """
    B, M, K, Cin = new_points.shape
    G = B * M
    Cout_pad = weights_t[-1].shape[0]

    budget, vmem_limit = _tpu_vmem_budget_and_limit()
    ncores = _num_tensorcores()

    # --- K chunking: keep the unrolled inner loop short; pad only if needed.
    tk = K if K <= 16 else 16
    K_pad = _round_up(K, tk)

    # --- Honest VMEM footprint: lane dims -> 128, bf16 sublane -> 16, f32 -> 8.
    cin_sub = _round_up(Cin, 16)
    cmax_sub = max(_round_up(w.shape[0], 16) for w in weights_t)
    w_bytes = sum(_round_up(w.shape[0], 16) * _round_up(w.shape[1], 128) * 2
                  for w in weights_t)
    b_bytes = sum(_round_up(b.shape[0], 8) * 128 * 4 for b in biases)

    def footprint(tg_):
        f = 2 * tk * cin_sub * tg_ * 2          # double-buffered bf16 input block
        f += 2 * Cout_pad * tg_ * 4             # resident + written-back out block
        f += 3 * cmax_sub * tg_ * 4             # live f32/bf16 intermediates per step
        return f + w_bytes + b_bytes

    # --- Group (lane) tiling.
    if G >= 128:
        tg = min(target_tg, _round_up(G, 128))
        while tg > 128 and footprint(tg) > budget:
            tg = max(128, (tg // 2) // 128 * 128)
        G_pad = _round_up(G, tg)
        # Only give the 'parallel' group axis >=2 steps when the chip can
        # actually shard it (megacore / v7x); on 1-TC parts keep the big tile.
        if ncores >= 2 and (G_pad // tg) < ncores and tg >= 256:
            tg = max(128, (tg // 2) // 128 * 128)
            G_pad = _round_up(G, tg)
    else:
        tg, G_pad = G, G    # tiny case: full-extent lane dim is legal

    # --- Transposed, lane-dense activation layout: (K, Cin, G), groups on lanes.
    x = new_points.reshape(G, K, Cin).astype(jnp.bfloat16)
    xt = jnp.transpose(x, (1, 2, 0))            # (K, Cin, G)
    if K_pad != K or G_pad != G:
        xt = jnp.pad(xt, ((0, K_pad - K), (0, 0), (0, G_pad - G)))

    grid = (G_pad // tg, K_pad // tk)

    in_specs = [pl.BlockSpec((tk, Cin, tg), lambda g, k: (k, 0, g))]
    args = [xt]
    for w, b in zip(weights_t, biases):
        in_specs.append(pl.BlockSpec(w.shape, lambda g, k: (0, 0)))
        in_specs.append(pl.BlockSpec(b.shape, lambda g, k: (0, 0)))
        args += [w, b]

    flops = 2 * G_pad * K_pad * sum(w.shape[0] * w.shape[1] for w in weights_t)
    bytes_accessed = (xt.size * 2
                      + sum(w.size * 2 for w in weights_t)
                      + sum(b.size * 4 for b in biases)
                      + Cout_pad * G_pad * 4)

    out = pl.pallas_call(
        _make_mlp_pool_kernel(len(weights_t), pooling, K, tk),
        out_shape=jax.ShapeDtypeStruct((Cout_pad, G_pad), jnp.float32),
        grid_spec=pltpu.PrefetchScalarGridSpec(
            num_scalar_prefetch=0,
            grid=grid,
            in_specs=in_specs,
            out_specs=pl.BlockSpec((Cout_pad, tg), lambda g, k: (0, g)),
        ),
        compiler_params=pltpu.CompilerParams(
            dimension_semantics=("parallel", "arbitrary"),
            vmem_limit_bytes=int(vmem_limit)),
        cost_estimate=pl.CostEstimate(flops=int(flops), transcendentals=0,
                                      bytes_accessed=int(bytes_accessed)),
    )(*args)

    # (Cout_pad, G) -> (B, M, Cout_pad); padded group columns dropped here.
    return jnp.transpose(out[:, :G]).reshape(B, M, Cout_pad)


# ----------------------------------------------------------------------------
# Module
# ----------------------------------------------------------------------------
class PointNetSAModulePallas:
    def __init__(self, M, radius, K, in_channels, mlp, group_all,
                 bn=True, pooling="max", use_xyz=True, key=None):
        self.M, self.radius, self.K = M, radius, K
        self.group_all = group_all
        self.pooling = pooling
        self.use_xyz = use_xyz
        self.out_channels = mlp[-1]
        key = jax.random.PRNGKey(42) if key is None else key
        self.fps_key, wkey = jax.random.split(key)

        # Deterministic parameter init. Conv2d-1x1 weights stored TRANSPOSED as
        # (C_out, C_in); inference-mode BatchNorm folded: scale goes into the
        # weight rows, bias kept separately (kernel epilogue = relu(W @ x + b)).
        # TODO(synk): training-mode BatchNorm (batch statistics) not modeled.
        eps = 1e-5
        weights_t, biases = [], []
        c_in = in_channels
        for c_out in mlp:
            wkey, k1, k2, k3 = jax.random.split(wkey, 4)
            w = jax.random.normal(k1, (c_out, c_in), jnp.float32) / jnp.sqrt(c_in)
            if bn:
                gamma = 1.0 + 0.1 * jax.random.normal(k2, (c_out,), jnp.float32)
                beta = 0.1 * jax.random.normal(k3, (c_out,), jnp.float32)
                running_mean = jnp.zeros((c_out,), jnp.float32)
                running_var = jnp.ones((c_out,), jnp.float32)
                scale = gamma / jnp.sqrt(running_var + eps)
                bias = beta - running_mean * scale
            else:
                scale = jnp.ones((c_out,), jnp.float32)
                bias = jnp.zeros((c_out,), jnp.float32)
            weights_t.append(w * scale[:, None])      # fold BN scale into weight rows
            biases.append(bias)
            c_in = c_out

        # Transposed layout puts channels on the SUBLANE axis, so only pad the
        # final layer's output channels to a multiple of 8 (zero rows -> zero
        # outputs, sliced off after the kernel). No 128-lane padding needed.
        cout_pad = _round_up(mlp[-1], 8)
        if cout_pad != mlp[-1]:
            weights_t[-1] = jnp.pad(weights_t[-1], ((0, cout_pad - mlp[-1]), (0, 0)))
            biases[-1] = jnp.pad(biases[-1], (0, cout_pad - mlp[-1]))

        self.weights = [w.astype(jnp.bfloat16) for w in weights_t]
        self.biases = [b.reshape(-1, 1).astype(jnp.float32) for b in biases]

    def __call__(self, xyz, points):
        if self.group_all:
            # TODO(synk): group_all (G == B, small) cannot shard the group axis
            # across v7x's two TensorCores; splitting the K reduction across
            # cores would need a second combine pass.
            new_xyz, new_points, _, _ = sample_and_group_all(
                xyz, points, self.use_xyz, feat_dtype=jnp.bfloat16)
        else:
            new_xyz, new_points, _, _ = sample_and_group(
                xyz=xyz, points=points, M=self.M, radius=self.radius,
                K=self.K, key=self.fps_key, use_xyz=self.use_xyz,
                feat_dtype=jnp.bfloat16)
        feats = mlp_and_pool(new_points, self.weights, self.biases,
                             pooling=self.pooling)
        return new_xyz, feats[:, :, :self.out_channels]


# ----------------------------------------------------------------------------
if __name__ == "__main__":
    key = jax.random.PRNGKey(0)
    B, N, Cp = 2, 32, 4          # batch, num input points, point-feature channels
    M, radius, K = 16, 0.5, 8    # num centroids, ball radius, samples per ball
    mlp = [16, 32]

    kx, kp, kw = jax.random.split(key, 3)
    xyz = jax.random.uniform(kx, (B, N, 3), jnp.float32)
    points = jax.random.normal(kp, (B, N, Cp), jnp.float32)

    module = PointNetSAModulePallas(
        M=M, radius=radius, K=K, in_channels=Cp + 3, mlp=mlp,
        group_all=False, bn=True, pooling="max", use_xyz=True, key=kw)

    new_xyz, new_feats = module(xyz, points)
    jax.block_until_ready((new_xyz, new_feats))

    assert new_xyz.shape == (B, M, 3), new_xyz.shape
    assert new_feats.shape == (B, M, mlp[-1]), new_feats.shape
    assert jnp.all(jnp.isfinite(new_feats))
    print("KERNEL_OK")
</pallas_src>

<mosaic_0001>
module attributes {stable_mosaic.version = 11 : i64} {
  func.func @kernel(%arg0: i32, %arg1: i32, %arg2: memref<8x7x32xbf16, #tpu.memory_space<vmem>>, %arg3: memref<16x7xbf16, #tpu.memory_space<vmem>>, %arg4: memref<16x1xf32, #tpu.memory_space<vmem>>, %arg5: memref<32x16xbf16, #tpu.memory_space<vmem>>, %arg6: memref<32x1xf32, #tpu.memory_space<vmem>>, %arg7: memref<32x32xf32, #tpu.memory_space<vmem>>) attributes {dimension_semantics = [#tpu.dimension_semantics<parallel>, #tpu.dimension_semantics<arbitrary>], iteration_bounds = array<i64: 1, 1>, scalar_prefetch = 0 : i64, scratch_operands = 0 : i64, tpu.core_type = #tpu.core_type<tc>, window_params = [{transform_indices = @transform_0, window_bounds = array<i64: 8, 7, 32>}, {pipeline_mode = #tpu.pipeline_mode<synchronous>, transform_indices = @transform_1, window_bounds = array<i64: 16, 7>}, {pipeline_mode = #tpu.pipeline_mode<synchronous>, transform_indices = @transform_2, window_bounds = array<i64: 16, 1>}, {pipeline_mode = #tpu.pipeline_mode<synchronous>, transform_indices = @transform_3, window_bounds = array<i64: 32, 16>}, {pipeline_mode = #tpu.pipeline_mode<synchronous>, transform_indices = @transform_4, window_bounds = array<i64: 32, 1>}, {transform_indices = @transform_5, window_bounds = array<i64: 32, 32>}]} {
    %c0 = arith.constant 0 : index
    %c0_0 = arith.constant 0 : index
    %c0_1 = arith.constant 0 : index
    %0 = vector.load %arg2[%c0, %c0_0, %c0_1] : memref<8x7x32xbf16, #tpu.memory_space<vmem>>, vector<1x7x32xbf16>
    %1 = vector.shape_cast %0 : vector<1x7x32xbf16> to vector<7x32xbf16>
    %c0_2 = arith.constant 0 : index
    %c0_3 = arith.constant 0 : index
    %2 = vector.load %arg3[%c0_2, %c0_3] : memref<16x7xbf16, #tpu.memory_space<vmem>>, vector<16x7xbf16>
    %c0_4 = arith.constant 0 : index
    %c0_5 = arith.constant 0 : index
    %3 = vector.load %arg4[%c0_4, %c0_5] : memref<16x1xf32, #tpu.memory_space<vmem>>, vector<16x1xf32>
    %cst = arith.constant dense<0.000000e+00> : vector<16x32xf32>
    %4 = tpu.matmul %2, %1, %cst {dimension_numbers = #tpu.dot_dimension_numbers<[1], [0], [0], [1], [0, 0, 1, 1], [], []>} : vector<16x7xbf16>, vector<7x32xbf16>, vector<16x32xf32> -> vector<16x32xf32>
    %5 = vector.broadcast %3 : vector<16x1xf32> to vector<16x32xf32>
    %6 = arith.addf %4, %5 : vector<16x32xf32>
    %cst_6 = arith.constant 0.000000e+00 : f32
    %7 = vector.broadcast %cst_6 : f32 to vector<16x32xf32>
    %8 = arith.maximumf %6, %7 : vector<16x32xf32>
    %9 = arith.truncf %8 : vector<16x32xf32> to vector<16x32xbf16>
    %c0_7 = arith.constant 0 : index
    %c0_8 = arith.constant 0 : index
    %10 = vector.load %arg5[%c0_7, %c0_8] : memref<32x16xbf16, #tpu.memory_space<vmem>>, vector<32x16xbf16>
    %c0_9 = arith.constant 0 : index
    %c0_10 = arith.constant 0 : index
    %11 = vector.load %arg6[%c0_9, %c0_10] : memref<32x1xf32, #tpu.memory_space<vmem>>, vector<32x1xf32>
    %cst_11 = arith.constant dense<0.000000e+00> : vector<32x32xf32>
    %12 = tpu.matmul %10, %9, %cst_11 {dimension_numbers = #tpu.dot_dimension_numbers<[1], [0], [0], [1], [0, 0, 1, 1], [], []>} : vector<32x16xbf16>, vector<16x32xbf16>, vector<32x32xf32> -> vector<32x32xf32>
    %13 = vector.broadcast %11 : vector<32x1xf32> to vector<32x32xf32>
    %14 = arith.addf %12, %13 : vector<32x32xf32>
    %cst_12 = arith.constant 0.000000e+00 : f32
    %15 = vector.broadcast %cst_12 : f32 to vector<32x32xf32>
    %16 = arith.maximumf %14, %15 : vector<32x32xf32>
    %c1 = arith.constant 1 : index
    %c0_13 = arith.constant 0 : index
    %c0_14 = arith.constant 0 : index
    %17 = vector.load %arg2[%c1, %c0_13, %c0_14] : memref<8x7x32xbf16, #tpu.memory_space<vmem>>, vector<1x7x32xbf16>
    %18 = vector.shape_cast %17 : vector<1x7x32xbf16> to vector<7x32xbf16>
    %c0_15 = arith.constant 0 : index
    %c0_16 = arith.constant 0 : index
    %19 = vector.load %arg3[%c0_15, %c0_16] : memref<16x7xbf16, #tpu.memory_space<vmem>>, vector<16x7xbf16>
    %c0_17 = arith.constant 0 : index
    %c0_18 = arith.constant 0 : index
    %20 = vector.load %arg4[%c0_17, %c0_18] : memref<16x1xf32, #tpu.memory_space<vmem>>, vector<16x1xf32>
    %cst_19 = arith.constant dense<0.000000e+00> : vector<16x32xf32>
    %21 = tpu.matmul %19, %18, %cst_19 {dimension_numbers = #tpu.dot_dimension_numbers<[1], [0], [0], [1], [0, 0, 1, 1], [], []>} : vector<16x7xbf16>, vector<7x32xbf16>, vector<16x32xf32> -> vector<16x32xf32>
    %22 = vector.broadcast %20 : vector<16x1xf32> to vector<16x32xf32>
    %23 = arith.addf %21, %22 : vector<16x32xf32>
    %cst_20 = arith.constant 0.000000e+00 : f32
    %24 = vector.broadcast %cst_20 : f32 to vector<16x32xf32>
    %25 = arith.maximumf %23, %24 : vector<16x32xf32>
    %26 = arith.truncf %25 : vector<16x32xf32> to vector<16x32xbf16>
    %c0_21 = arith.constant 0 : index
    %c0_22 = arith.constant 0 : index
    %27 = vector.load %arg5[%c0_21, %c0_22] : memref<32x16xbf16, #tpu.memory_space<vmem>>, vector<32x16xbf16>
    %c0_23 = arith.constant 0 : index
    %c0_24 = arith.constant 0 : index
    %28 = vector.load %arg6[%c0_23, %c0_24] : memref<32x1xf32, #tpu.memory_space<vmem>>, vector<32x1xf32>
    %cst_25 = arith.constant dense<0.000000e+00> : vector<32x32xf32>
    %29 = tpu.matmul %27, %26, %cst_25 {dimension_numbers = #tpu.dot_dimension_numbers<[1], [0], [0], [1], [0, 0, 1, 1], [], []>} : vector<32x16xbf16>, vector<16x32xbf16>, vector<32x32xf32> -> vector<32x32xf32>
    %30 = vector.broadcast %28 : vector<32x1xf32> to vector<32x32xf32>
    %31 = arith.addf %29, %30 : vector<32x32xf32>
    %cst_26 = arith.constant 0.000000e+00 : f32
    %32 = vector.broadcast %cst_26 : f32 to vector<32x32xf32>
    %33 = arith.maximumf %31, %32 : vector<32x32xf32>
    %34 = arith.maximumf %16, %33 : vector<32x32xf32>
    %c2 = arith.constant 2 : index
    %c0_27 = arith.constant 0 : index
    %c0_28 = arith.constant 0 : index
    %35 = vector.load %arg2[%c2, %c0_27, %c0_28] : memref<8x7x32xbf16, #tpu.memory_space<vmem>>, vector<1x7x32xbf16>
    %36 = vector.shape_cast %35 : vector<1x7x32xbf16> to vector<7x32xbf16>
    %c0_29 = arith.constant 0 : index
    %c0_30 = arith.constant 0 : index
    %37 = vector.load %arg3[%c0_29, %c0_30] : memref<16x7xbf16, #tpu.memory_space<vmem>>, vector<16x7xbf16>
    %c0_31 = arith.constant 0 : index
    %c0_32 = arith.constant 0 : index
    %38 = vector.load %arg4[%c0_31, %c0_32] : memref<16x1xf32, #tpu.memory_space<vmem>>, vector<16x1xf32>
    %cst_33 = arith.constant dense<0.000000e+00> : vector<16x32xf32>
    %39 = tpu.matmul %37, %36, %cst_33 {dimension_numbers = #tpu.dot_dimension_numbers<[1], [0], [0], [1], [0, 0, 1, 1], [], []>} : vector<16x7xbf16>, vector<7x32xbf16>, vector<16x32xf32> -> vector<16x32xf32>
    %40 = vector.broadcast %38 : vector<16x1xf32> to vector<16x32xf32>
    %41 = arith.addf %39, %40 : vector<16x32xf32>
    %cst_34 = arith.constant 0.000000e+00 : f32
    %42 = vector.broadcast %cst_34 : f32 to vector<16x32xf32>
    %43 = arith.maximumf %41, %42 : vector<16x32xf32>
    %44 = arith.truncf %43 : vector<16x32xf32> to vector<16x32xbf16>
    %c0_35 = arith.constant 0 : index
    %c0_36 = arith.constant 0 : index
    %45 = vector.load %arg5[%c0_35, %c0_36] : memref<32x16xbf16, #tpu.memory_space<vmem>>, vector<32x16xbf16>
    %c0_37 = arith.constant 0 : index
    %c0_38 = arith.constant 0 : index
    %46 = vector.load %arg6[%c0_37, %c0_38] : memref<32x1xf32, #tpu.memory_space<vmem>>, vector<32x1xf32>
    %cst_39 = arith.constant dense<0.000000e+00> : vector<32x32xf32>
    %47 = tpu.matmul %45, %44, %cst_39 {dimension_numbers = #tpu.dot_dimension_numbers<[1], [0], [0], [1], [0, 0, 1, 1], [], []>} : vector<32x16xbf16>, vector<16x32xbf16>, vector<32x32xf32> -> vector<32x32xf32>
    %48 = vector.broadcast %46 : vector<32x1xf32> to vector<32x32xf32>
    %49 = arith.addf %47, %48 : vector<32x32xf32>
    %cst_40 = arith.constant 0.000000e+00 : f32
    %50 = vector.broadcast %cst_40 : f32 to vector<32x32xf32>
    %51 = arith.maximumf %49, %50 : vector<32x32xf32>
    %52 = arith.maximumf %34, %51 : vector<32x32xf32>
    %c3 = arith.constant 3 : index
    %c0_41 = arith.constant 0 : index
    %c0_42 = arith.constant 0 : index
    %53 = vector.load %arg2[%c3, %c0_41, %c0_42] : memref<8x7x32xbf16, #tpu.memory_space<vmem>>, vector<1x7x32xbf16>
    %54 = vector.shape_cast %53 : vector<1x7x32xbf16> to vector<7x32xbf16>
    %c0_43 = arith.constant 0 : index
    %c0_44 = arith.constant 0 : index
    %55 = vector.load %arg3[%c0_43, %c0_44] : memref<16x7xbf16, #tpu.memory_space<vmem>>, vector<16x7xbf16>
    %c0_45 = arith.constant 0 : index
    %c0_46 = arith.constant 0 : index
    %56 = vector.load %arg4[%c0_45, %c0_46] : memref<16x1xf32, #tpu.memory_space<vmem>>, vector<16x1xf32>
    %cst_47 = arith.constant dense<0.000000e+00> : vector<16x32xf32>
    %57 = tpu.matmul %55, %54, %cst_47 {dimension_numbers = #tpu.dot_dimension_numbers<[1], [0], [0], [1], [0, 0, 1, 1], [], []>} : vector<16x7xbf16>, vector<7x32xbf16>, vector<16x32xf32> -> vector<16x32xf32>
    %58 = vector.broadcast %56 : vector<16x1xf32> to vector<16x32xf32>
    %59 = arith.addf %57, %58 : vector<16x32xf32>
    %cst_48 = arith.constant 0.000000e+00 : f32
    %60 = vector.broadcast %cst_48 : f32 to vector<16x32xf32>
    %61 = arith.maximumf %59, %60 : vector<16x32xf32>
    %62 = arith.truncf %61 : vector<16x32xf32> to vector<16x32xbf16>
    %c0_49 = arith.constant 0 : index
    %c0_50 = arith.constant 0 : index
    %63 = vector.load %arg5[%c0_49, %c0_50] : memref<32x16xbf16, #tpu.memory_space<vmem>>, vector<32x16xbf16>
    %c0_51 = arith.constant 0 : index
    %c0_52 = arith.constant 0 : index
    %64 = vector.load %arg6[%c0_51, %c0_52] : memref<32x1xf32, #tpu.memory_space<vmem>>, vector<32x1xf32>
    %cst_53 = arith.constant dense<0.000000e+00> : vector<32x32xf32>
    %65 = tpu.matmul %63, %62, %cst_53 {dimension_numbers = #tpu.dot_dimension_numbers<[1], [0], [0], [1], [0, 0, 1, 1], [], []>} : vector<32x16xbf16>, vector<16x32xbf16>, vector<32x32xf32> -> vector<32x32xf32>
    %66 = vector.broadcast %64 : vector<32x1xf32> to vector<32x32xf32>
    %67 = arith.addf %65, %66 : vector<32x32xf32>
    %cst_54 = arith.constant 0.000000e+00 : f32
    %68 = vector.broadcast %cst_54 : f32 to vector<32x32xf32>
    %69 = arith.maximumf %67, %68 : vector<32x32xf32>
    %70 = arith.maximumf %52, %69 : vector<32x32xf32>
    %c4 = arith.constant 4 : index
    %c0_55 = arith.constant 0 : index
    %c0_56 = arith.constant 0 : index
    %71 = vector.load %arg2[%c4, %c0_55, %c0_56] : memref<8x7x32xbf16, #tpu.memory_space<vmem>>, vector<1x7x32xbf16>
    %72 = vector.shape_cast %71 : vector<1x7x32xbf16> to vector<7x32xbf16>
    %c0_57 = arith.constant 0 : index
    %c0_58 = arith.constant 0 : index
    %73 = vector.load %arg3[%c0_57, %c0_58] : memref<16x7xbf16, #tpu.memory_space<vmem>>, vector<16x7xbf16>
    %c0_59 = arith.constant 0 : index
    %c0_60 = arith.constant 0 : index
    %74 = vector.load %arg4[%c0_59, %c0_60] : memref<16x1xf32, #tpu.memory_space<vmem>>, vector<16x1xf32>
    %cst_61 = arith.constant dense<0.000000e+00> : vector<16x32xf32>
    %75 = tpu.matmul %73, %72, %cst_61 {dimension_numbers = #tpu.dot_dimension_numbers<[1], [0], [0], [1], [0, 0, 1, 1], [], []>} : vector<16x7xbf16>, vector<7x32xbf16>, vector<16x32xf32> -> vector<16x32xf32>
    %76 = vector.broadcast %74 : vector<16x1xf32> to vector<16x32xf32>
    %77 = arith.addf %75, %76 : vector<16x32xf32>
    %cst_62 = arith.constant 0.000000e+00 : f32
    %78 = vector.broadcast %cst_62 : f32 to vector<16x32xf32>
    %79 = arith.maximumf %77, %78 : vector<16x32xf32>
    %80 = arith.truncf %79 : vector<16x32xf32> to vector<16x32xbf16>
    %c0_63 = arith.constant 0 : index
    %c0_64 = arith.constant 0 : index
    %81 = vector.load %arg5[%c0_63, %c0_64] : memref<32x16xbf16, #tpu.memory_space<vmem>>, vector<32x16xbf16>
    %c0_65 = arith.constant 0 : index
    %c0_66 = arith.constant 0 : index
    %82 = vector.load %arg6[%c0_65, %c0_66] : memref<32x1xf32, #tpu.memory_space<vmem>>, vector<32x1xf32>
    %cst_67 = arith.constant dense<0.000000e+00> : vector<32x32xf32>
    %83 = tpu.matmul %81, %80, %cst_67 {dimension_numbers = #tpu.dot_dimension_numbers<[1], [0], [0], [1], [0, 0, 1, 1], [], []>} : vector<32x16xbf16>, vector<16x32xbf16>, vector<32x32xf32> -> vector<32x32xf32>
    %84 = vector.broadcast %82 : vector<32x1xf32> to vector<32x32xf32>
    %85 = arith.addf %83, %84 : vector<32x32xf32>
    %cst_68 = arith.constant 0.000000e+00 : f32
    %86 = vector.broadcast %cst_68 : f32 to vector<32x32xf32>
    %87 = arith.maximumf %85, %86 : vector<32x32xf32>
    %88 = arith.maximumf %70, %87 : vector<32x32xf32>
    %c5 = arith.constant 5 : index
    %c0_69 = arith.constant 0 : index
    %c0_70 = arith.constant 0 : index
    %89 = vector.load %arg2[%c5, %c0_69, %c0_70] : memref<8x7x32xbf16, #tpu.memory_space<vmem>>, vector<1x7x32xbf16>
    %90 = vector.shape_cast %89 : vector<1x7x32xbf16> to vector<7x32xbf16>
    %c0_71 = arith.constant 0 : index
    %c0_72 = arith.constant 0 : index
    %91 = vector.load %arg3[%c0_71, %c0_72] : memref<16x7xbf16, #tpu.memory_space<vmem>>, vector<16x7xbf16>
    %c0_73 = arith.constant 0 : index
    %c0_74 = arith.constant 0 : index
    %92 = vector.load %arg4[%c0_73, %c0_74] : memref<16x1xf32, #tpu.memory_space<vmem>>, vector<16x1xf32>
    %cst_75 = arith.constant dense<0.000000e+00> : vector<16x32xf32>
    %93 = tpu.matmul %91, %90, %cst_75 {dimension_numbers = #tpu.dot_dimension_numbers<[1], [0], [0], [1], [0, 0, 1, 1], [], []>} : vector<16x7xbf16>, vector<7x32xbf16>, vector<16x32xf32> -> vector<16x32xf32>
    %94 = vector.broadcast %92 : vector<16x1xf32> to vector<16x32xf32>
    %95 = arith.addf %93, %94 : vector<16x32xf32>
    %cst_76 = arith.constant 0.000000e+00 : f32
    %96 = vector.broadcast %cst_76 : f32 to vector<16x32xf32>
    %97 = arith.maximumf %95, %96 : vector<16x32xf32>
    %98 = arith.truncf %97 : vector<16x32xf32> to vector<16x32xbf16>
    %c0_77 = arith.constant 0 : index
    %c0_78 = arith.constant 0 : index
    %99 = vector.load %arg5[%c0_77, %c0_78] : memref<32x16xbf16, #tpu.memory_space<vmem>>, vector<32x16xbf16>
    %c0_79 = arith.constant 0 : index
    %c0_80 = arith.constant 0 : index
    %100 = vector.load %arg6[%c0_79, %c0_80] : memref<32x1xf32, #tpu.memory_space<vmem>>, vector<32x1xf32>
    %cst_81 = arith.constant dense<0.000000e+00> : vector<32x32xf32>
    %101 = tpu.matmul %99, %98, %cst_81 {dimension_numbers = #tpu.dot_dimension_numbers<[1], [0], [0], [1], [0, 0, 1, 1], [], []>} : vector<32x16xbf16>, vector<16x32xbf16>, vector<32x32xf32> -> vector<32x32xf32>
    %102 = vector.broadcast %100 : vector<32x1xf32> to vector<32x32xf32>
    %103 = arith.addf %101, %102 : vector<32x32xf32>
    %cst_82 = arith.constant 0.000000e+00 : f32
    %104 = vector.broadcast %cst_82 : f32 to vector<32x32xf32>
    %105 = arith.maximumf %103, %104 : vector<32x32xf32>
    %106 = arith.maximumf %88, %105 : vector<32x32xf32>
    %c6 = arith.constant 6 : index
    %c0_83 = arith.constant 0 : index
    %c0_84 = arith.constant 0 : index
    %107 = vector.load %arg2[%c6, %c0_83, %c0_84] : memref<8x7x32xbf16, #tpu.memory_space<vmem>>, vector<1x7x32xbf16>
    %108 = vector.shape_cast %107 : vector<1x7x32xbf16> to vector<7x32xbf16>
    %c0_85 = arith.constant 0 : index
    %c0_86 = arith.constant 0 : index
    %109 = vector.load %arg3[%c0_85, %c0_86] : memref<16x7xbf16, #tpu.memory_space<vmem>>, vector<16x7xbf16>
    %c0_87 = arith.constant 0 : index
    %c0_88 = arith.constant 0 : index
    %110 = vector.load %arg4[%c0_87, %c0_88] : memref<16x1xf32, #tpu.memory_space<vmem>>, vector<16x1xf32>
    %cst_89 = arith.constant dense<0.000000e+00> : vector<16x32xf32>
    %111 = tpu.matmul %109, %108, %cst_89 {dimension_numbers = #tpu.dot_dimension_numbers<[1], [0], [0], [1], [0, 0, 1, 1], [], []>} : vector<16x7xbf16>, vector<7x32xbf16>, vector<16x32xf32> -> vector<16x32xf32>
    %112 = vector.broadcast %110 : vector<16x1xf32> to vector<16x32xf32>
    %113 = arith.addf %111, %112 : vector<16x32xf32>
    %cst_90 = arith.constant 0.000000e+00 : f32
    %114 = vector.broadcast %cst_90 : f32 to vector<16x32xf32>
    %115 = arith.maximumf %113, %114 : vector<16x32xf32>
    %116 = arith.truncf %115 : vector<16x32xf32> to vector<16x32xbf16>
    %c0_91 = arith.constant 0 : index
    %c0_92 = arith.constant 0 : index
    %117 = vector.load %arg5[%c0_91, %c0_92] : memref<32x16xbf16, #tpu.memory_space<vmem>>, vector<32x16xbf16>
    %c0_93 = arith.constant 0 : index
    %c0_94 = arith.constant 0 : index
    %118 = vector.load %arg6[%c0_93, %c0_94] : memref<32x1xf32, #tpu.memory_space<vmem>>, vector<32x1xf32>
    %cst_95 = arith.constant dense<0.000000e+00> : vector<32x32xf32>
    %119 = tpu.matmul %117, %116, %cst_95 {dimension_numbers = #tpu.dot_dimension_numbers<[1], [0], [0], [1], [0, 0, 1, 1], [], []>} : vector<32x16xbf16>, vector<16x32xbf16>, vector<32x32xf32> -> vector<32x32xf32>
    %120 = vector.broadcast %118 : vector<32x1xf32> to vector<32x32xf32>
    %121 = arith.addf %119, %120 : vector<32x32xf32>
    %cst_96 = arith.constant 0.000000e+00 : f32
    %122 = vector.broadcast %cst_96 : f32 to vector<32x32xf32>
    %123 = arith.maximumf %121, %122 : vector<32x32xf32>
    %124 = arith.maximumf %106, %123 : vector<32x32xf32>
    %c7 = arith.constant 7 : index
    %c0_97 = arith.constant 0 : index
    %c0_98 = arith.constant 0 : index
    %125 = vector.load %arg2[%c7, %c0_97, %c0_98] : memref<8x7x32xbf16, #tpu.memory_space<vmem>>, vector<1x7x32xbf16>
    %126 = vector.shape_cast %125 : vector<1x7x32xbf16> to vector<7x32xbf16>
    %c0_99 = arith.constant 0 : index
    %c0_100 = arith.constant 0 : index
    %127 = vector.load %arg3[%c0_99, %c0_100] : memref<16x7xbf16, #tpu.memory_space<vmem>>, vector<16x7xbf16>
    %c0_101 = arith.constant 0 : index
    %c0_102 = arith.constant 0 : index
    %128 = vector.load %arg4[%c0_101, %c0_102] : memref<16x1xf32, #tpu.memory_space<vmem>>, vector<16x1xf32>
    %cst_103 = arith.constant dense<0.000000e+00> : vector<16x32xf32>
    %129 = tpu.matmul %127, %126, %cst_103 {dimension_numbers = #tpu.dot_dimension_numbers<[1], [0], [0], [1], [0, 0, 1, 1], [], []>} : vector<16x7xbf16>, vector<7x32xbf16>, vector<16x32xf32> -> vector<16x32xf32>
    %130 = vector.broadcast %128 : vector<16x1xf32> to vector<16x32xf32>
    %131 = arith.addf %129, %130 : vector<16x32xf32>
    %cst_104 = arith.constant 0.000000e+00 : f32
    %132 = vector.broadcast %cst_104 : f32 to vector<16x32xf32>
    %133 = arith.maximumf %131, %132 : vector<16x32xf32>
    %134 = arith.truncf %133 : vector<16x32xf32> to vector<16x32xbf16>
    %c0_105 = arith.constant 0 : index
    %c0_106 = arith.constant 0 : index
    %135 = vector.load %arg5[%c0_105, %c0_106] : memref<32x16xbf16, #tpu.memory_space<vmem>>, vector<32x16xbf16>
    %c0_107 = arith.constant 0 : index
    %c0_108 = arith.constant 0 : index
    %136 = vector.load %arg6[%c0_107, %c0_108] : memref<32x1xf32, #tpu.memory_space<vmem>>, vector<32x1xf32>
    %cst_109 = arith.constant dense<0.000000e+00> : vector<32x32xf32>
    %137 = tpu.matmul %135, %134, %cst_109 {dimension_numbers = #tpu.dot_dimension_numbers<[1], [0], [0], [1], [0, 0, 1, 1], [], []>} : vector<32x16xbf16>, vector<16x32xbf16>, vector<32x32xf32> -> vector<32x32xf32>
    %138 = vector.broadcast %136 : vector<32x1xf32> to vector<32x32xf32>
    %139 = arith.addf %137, %138 : vector<32x32xf32>
    %cst_110 = arith.constant 0.000000e+00 : f32
    %140 = vector.broadcast %cst_110 : f32 to vector<32x32xf32>
    %141 = arith.maximumf %139, %140 : vector<32x32xf32>
    %142 = arith.maximumf %124, %141 : vector<32x32xf32>
    %c0_i32 = arith.constant 0 : i32
    %143 = arith.cmpi eq, %arg1, %c0_i32 : i32
    %144 = arith.extui %143 : i1 to i32
    %c0_i32_111 = arith.constant 0 : i32
    %145 = arith.cmpi ne, %144, %c0_i32_111 : i32
    scf.if %145 {
      %c0_114 = arith.constant 0 : index
      %c0_115 = arith.constant 0 : index
      %149 = vector.load %arg7[%c0_114, %c0_115] : memref<32x32xf32, #tpu.memory_space<vmem>>, vector<32x32xf32>
      tpu.vector_store %arg7[%c0_114, %c0_115], %142 {strides = array<i32>} : memref<32x32xf32, #tpu.memory_space<vmem>>, vector<32x32xf32>,
    } else {
    }
    %c0_i32_112 = arith.constant 0 : i32
    %146 = arith.cmpi sgt, %arg1, %c0_i32_112 : i32
    %147 = arith.extui %146 : i1 to i32
    %c0_i32_113 = arith.constant 0 : i32
    %148 = arith.cmpi ne, %147, %c0_i32_113 : i32
    scf.if %148 {
      %c0_114 = arith.constant 0 : index
      %c0_115 = arith.constant 0 : index
      %149 = vector.load %arg7[%c0_114, %c0_115] : memref<32x32xf32, #tpu.memory_space<vmem>>, vector<32x32xf32>
      %150 = arith.maximumf %149, %142 : vector<32x32xf32>
      %c0_116 = arith.constant 0 : index
      %c0_117 = arith.constant 0 : index
      %151 = vector.load %arg7[%c0_116, %c0_117] : memref<32x32xf32, #tpu.memory_space<vmem>>, vector<32x32xf32>
      tpu.vector_store %arg7[%c0_116, %c0_117], %150 {strides = array<i32>} : memref<32x32xf32, #tpu.memory_space<vmem>>, vector<32x32xf32>,
    } else {
    }
    return
  }
  func.func @transform_0(%arg0: i32, %arg1: i32) -> (i32, i32, i32) {
    %c0_i32 = arith.constant 0 : i32
    %c0_i32_0 = arith.constant 0 : i32
    return %arg1, %c0_i32, %arg0 : i32, i32, i32
  }
  func.func @transform_1(%arg0: i32, %arg1: i32) -> (i32, i32) {
    %c0_i32 = arith.constant 0 : i32
    %c0_i32_0 = arith.constant 0 : i32
    %c0_i32_1 = arith.constant 0 : i32
    return %c0_i32, %c0_i32_0 : i32, i32
  }
  func.func @transform_2(%arg0: i32, %arg1: i32) -> (i32, i32) {
    %c0_i32 = arith.constant 0 : i32
    %c0_i32_0 = arith.constant 0 : i32
    %c0_i32_1 = arith.constant 0 : i32
    return %c0_i32, %c0_i32_0 : i32, i32
  }
  func.func @transform_3(%arg0: i32, %arg1: i32) -> (i32, i32) {
    %c0_i32 = arith.constant 0 : i32
    %c0_i32_0 = arith.constant 0 : i32
    %c0_i32_1 = arith.constant 0 : i32
    return %c0_i32, %c0_i32_0 : i32, i32
  }
  func.func @transform_4(%arg0: i32, %arg1: i32) -> (i32, i32) {
    %c0_i32 = arith.constant 0 : i32
    %c0_i32_0 = arith.constant 0 : i32
    %c0_i32_1 = arith.constant 0 : i32
    return %c0_i32, %c0_i32_0 : i32, i32
  }
  func.func @transform_5(%arg0: i32, %arg1: i32) -> (i32, i32) {
    %c0_i32 = arith.constant 0 : i32
    %c0_i32_0 = arith.constant 0 : i32
    return %c0_i32, %arg0 : i32, i32
  }
}

</mosaic_0001>

<llo_original>
// kernel: tpu_custom_call.1
$region0: #{tpu_custom_call.1}
  #allocation0 [shape = 'u32[]', space=smem, size = 0x4, offset = 0x4, fixed_abs, tag = 'smem constant byte address 0x4 - core index']
  #allocation1 [shape = 'u32[144,128]{1,0:T(1,128)}', space=vmem, size = 0x12000, scoped, tag = 'internal scratch']
  %s0 = inlined_call_operand.vmem [shape: bf16[8,7,32], index: 0, kind: input, shape index: {}]
  %s1 = inlined_call_operand.vmem [shape: bf16[16,7], index: 1, kind: input, shape index: {}]
  %s2 = inlined_call_operand.vmem [shape: f32[16,1], index: 2, kind: input, shape index: {}]
  %s3 = inlined_call_operand.vmem [shape: bf16[32,16], index: 3, kind: input, shape index: {}]
  %s4 = inlined_call_operand.vmem [shape: f32[32,1], index: 4, kind: input, shape index: {}]
  %s5 = inlined_call_operand.hbm [shape: f32[32,32], index: 5, kind: output, shape index: {}]
  %s6 = sld [smem:[#allocation0]]
  $region38: #{tpu_custom_call.1} parent=0
    _
  %s8 = ssub.s32 1, %s6
  %s9 = scalar_select 0, %s8, %s6
  $region1: #{tpu_custom_call.1} parent=0
    #allocation2 [shape = 'u8[16384]{0}', space=vmem, size = 0x4000, scoped, tag = 'output window, operand 0, single buffered']
    #allocation3 [shape = 's32[1]{0}', space=sflag, size = 0x4, scoped, tag = 'scoped memory for tpu_custom_call.1']
    %10 = vsyncpa [#allocation3], 0
    // Predicated region
    $region2: #{tpu_custom_call.1} parent=1 // pred_check
      _
    $region3: #{tpu_custom_call.1} parent=1 // pred_check_branch
      %12 = sbr.rel (0) target = $region5
    $region4: #{tpu_custom_call.1} parent=1 // pred_region
      _
    $region5: #{tpu_custom_call.1} parent=1 // pred_fallthru
      _
    // Predicated region
    $region6: #{tpu_custom_call.1} parent=1 // pred_check
      _
    $region7: #{tpu_custom_call.1} parent=1 // pred_check_branch
      %14 = sbr.rel (0) target = $region9
    $region8: #{tpu_custom_call.1} parent=1 // pred_region
      _
    $region9: #{tpu_custom_call.1} parent=1 // pred_fallthru
      _
    // Predicated region
    $region10: #{tpu_custom_call.1} parent=1 // pred_check
      _
    $region11: #{tpu_custom_call.1} parent=1 // pred_check_branch
      %16 = sbr.rel (0) target = $region13
    $region12: #{tpu_custom_call.1} parent=1 // pred_region
      _
    $region13: #{tpu_custom_call.1} parent=1 // pred_fallthru
      _
    // Predicated region
    $region14: #{tpu_custom_call.1} parent=1 // pred_check
      _
    $region15: #{tpu_custom_call.1} parent=1 // pred_check_branch
      %18 = sbr.rel (0) target = $region17
    $region16: #{tpu_custom_call.1} parent=1 // pred_region
      _
    $region17: #{tpu_custom_call.1} parent=1 // pred_fallthru
      _
    // Predicated region
    $region18: #{tpu_custom_call.1} parent=1 // pred_check
      _
    $region19: #{tpu_custom_call.1} parent=1 // pred_check_branch
      %20 = sbr.rel (0) target = $region21
    $region20: #{tpu_custom_call.1} parent=1 // pred_region
      _
    $region21: #{tpu_custom_call.1} parent=1 // pred_fallthru
      _
    %v22 = vld [vmem:[%s0] sm:$0xf]
    %v23 = vld [vmem:[%s1] sm:$0xf]
    %v24 = vld [vmem:[%s1 + $0x4] sm:$0xf]
    %v25 = vld [vmem:[%s2] sm:$0xff]
    %v26 = vld [vmem:[%s2 + $0x8] sm:$0xff]
    %28 = vset.pattern.permute.xlu0 0
    %29 = vperm.xlu0 %28, %v25
    %v30 = vpop.permute.xlu0 %29
    %33 = vset.pattern.permute.xlu0 0
    %34 = vperm.xlu0 %33, %v26
    %v35 = vpop.permute.xlu0 %34
    %v39 = vunpack.c.l.b16 %v23
    %v40 = vunpack.c.l.b16 %v24
    %v41 = vpack.c.b16 %v40, %v39
    %vm42 = vcmask 56320
    %v44 = vsel %vm42, %v41, 0
    %vm46 = vcmask 1042432
    %vm47 = vcmask 1043456
    %v48 = vsel %vm46, 4294967295, 65535
    %v49 = vsel %vm47, %v48, 0
    %v51 = vand.u32 %v22, %v49
    %53 = vmatprep.subr.bf16.mxu0 0
    %54 = vmatpush1.bf16.msra.mxu0 %v51
    %55 = vmatprep.subr.bf16.mxu0 0
    %56 = vmatpush1.bf16.msra.mxu0 0
    %57 = vmatprep.subr.bf16.mxu0 0
    %58 = vmatpush1.bf16.msra.mxu0 0
    %59 = vmatprep.subr.bf16.mxu0 0
    %60 = vmatpush1.bf16.msra.mxu0 0
    %61 = vmatprep.subr.bf16.mxu0 0
    %62 = vmatpush1.bf16.msra.mxu0 0
    %63 = vmatprep.subr.bf16.mxu0 0
    %64 = vmatpush1.bf16.msra.mxu0 0
    %65 = vmatprep.subr.bf16.mxu0 0
    %66 = vmatpush1.bf16.msra.mxu0 0
    %67 = vmatprep.subr.bf16.mxu0 0
    %68 = vmatpush1.bf16.msra.mxu0 0
    %69 = vmatprep.subr.bf16.mxu0 0
    %70 = vmatpush1.bf16.msra.mxu0 0
    %71 = vmatprep.subr.bf16.mxu0 0
    %72 = vmatpush1.bf16.msra.mxu0 0
    %73 = vmatprep.subr.bf16.mxu0 0
    %74 = vmatpush1.bf16.msra.mxu0 0
    %75 = vmatprep.subr.bf16.mxu0 0
    %76 = vmatpush1.bf16.msra.mxu0 0
    %77 = vmatprep.subr.bf16.mxu0 0
    %78 = vmatpush1.bf16.msra.mxu0 0
    %79 = vmatprep.subr.bf16.mxu0 0
    %80 = vmatpush1.bf16.msra.mxu0 0
    %81 = vmatprep.subr.bf16.mxu0 0
    %82 = vmatpush1.bf16.msra.mxu0 0
    %83 = vmatprep.subr.bf16.mxu0 0
    %84 = vmatpush1.bf16.msra.mxu0 0
    %85 = vmatprep.mubr.bf16.mxu0 0
    %86 = vmatmul.mubr.bf16.gmra.mrb[0].mxu0 %v44
    %v87 = vpop.f32.mrb[0].mxu0
    %v88 = vadd.f32 %v30, %v87
    %v89 = vpop.f32.mrb[0].mxu0
    %v90 = vpop.f32.mrb[0].mxu0
    %v91 = vadd.f32 %v35, %v90
    %v92 = vpop.f32.mrb[0].mxu0
    %93 = vdwg.mxu0
    %v94 = vmax.f32 %v88, 0.0
    %v95 = vmax.f32 %v91, 0.0
    %v96 = vpack.c.bf16 %v95, %v94
    %v97 = vld [vmem:[%s3] sm:$0xf]
    %v98 = vld [vmem:[%s3 + $0x4] sm:$0xf]
    %v99 = vld [vmem:[%s3 + $0x8] sm:$0xf]
    %v100 = vld [vmem:[%s3 + $0xc] sm:$0xf]
    %v101 = vld [vmem:[%s4] sm:$0xff]
    %v102 = vld [vmem:[%s4 + $0x8] sm:$0xff]
    %v103 = vld [vmem:[%s4 + $0x10] sm:$0xff]
    %v104 = vld [vmem:[%s4 + $0x18] sm:$0xff]
    %106 = vset.pattern.permute.xlu0 0
    %107 = vperm.xlu0 %106, %v101
    %v108 = vpop.permute.xlu0 %107
    %111 = vset.pattern.permute.xlu0 0
    %112 = vperm.xlu0 %111, %v102
    %v113 = vpop.permute.xlu0 %112
    %116 = vset.pattern.permute.xlu0 0
    %117 = vperm.xlu0 %116, %v103
    %v118 = vpop.permute.xlu0 %117
    %121 = vset.pattern.permute.xlu0 0
    %122 = vperm.xlu0 %121, %v104
    %v123 = vpop.permute.xlu0 %122
    %v129 = vunpack.c.l.b16 %v97
    %v130 = vunpack.c.l.b16 %v98
    %v131 = vunpack.c.l.b16 %v99
    %v132 = vunpack.c.l.b16 %v100
    %v133 = vpack.c.b16 %v130, %v129
    %v134 = vpack.c.b16 %v132, %v131
    %vm135 = vcmask 130048
    %v137 = vsel %vm135, %v133, 0
    %v140 = vsel %vm135, %v134, 0
    %142 = vmatprep.subr.bf16.mxu0 0
    %143 = vmatpush1.bf16.msra.mxu0 %v96
    %144 = vmatprep.subr.bf16.mxu0 0
    %145 = vmatpush1.bf16.msra.mxu0 0
    %146 = vmatprep.subr.bf16.mxu0 0
    %147 = vmatpush1.bf16.msra.mxu0 0
    %148 = vmatprep.subr.bf16.mxu0 0
    %149 = vmatpush1.bf16.msra.mxu0 0
    %150 = vmatprep.subr.bf16.mxu0 0
    %151 = vmatpush1.bf16.msra.mxu0 0
    %152 = vmatprep.subr.bf16.mxu0 0
    %153 = vmatpush1.bf16.msra.mxu0 0
    %154 = vmatprep.subr.bf16.mxu0 0
    %155 = vmatpush1.bf16.msra.mxu0 0
    %156 = vmatprep.subr.bf16.mxu0 0
    %157 = vmatpush1.bf16.msra.mxu0 0
    %158 = vmatprep.subr.bf16.mxu0 0
    %159 = vmatpush1.bf16.msra.mxu0 0
    %160 = vmatprep.subr.bf16.mxu0 0
    %161 = vmatpush1.bf16.msra.mxu0 0
    %162 = vmatprep.subr.bf16.mxu0 0
    %163 = vmatpush1.bf16.msra.mxu0 0
    %164 = vmatprep.subr.bf16.mxu0 0
    %165 = vmatpush1.bf16.msra.mxu0 0
    %166 = vmatprep.subr.bf16.mxu0 0
    %167 = vmatpush1.bf16.msra.mxu0 0
    %168 = vmatprep.subr.bf16.mxu0 0
    %169 = vmatpush1.bf16.msra.mxu0 0
    %170 = vmatprep.subr.bf16.mxu0 0
    %171 = vmatpush1.bf16.msra.mxu0 0
    %172 = vmatprep.subr.bf16.mxu0 0
    %173 = vmatpush1.bf16.msra.mxu0 0
    %174 = vmatprep.mubr.bf16.mxu0 0
    %175 = vmatmul.mubr.bf16.gmra.mrb[0].mxu0 %v137
    %v176 = vpop.f32.mrb[0].mxu0
    %v177 = vadd.f32 %v108, %v176
    %v178 = vpop.f32.mrb[0].mxu0
    %v179 = vpop.f32.mrb[0].mxu0
    %v180 = vadd.f32 %v113, %v179
    %v181 = vpop.f32.mrb[0].mxu0
    %182 = vmatprep.mubr.bf16.mxu0 0
    %183 = vmatmul.mubr.bf16.gmra.mrb[0].mxu0 %v140
    %v184 = vpop.f32.mrb[0].mxu0
    %v185 = vadd.f32 %v118, %v184
    %v186 = vpop.f32.mrb[0].mxu0
    %v187 = vpop.f32.mrb[0].mxu0
    %v188 = vadd.f32 %v123, %v187
    %v189 = vpop.f32.mrb[0].mxu0
    %190 = vdwg.mxu0
    %v191 = vmax.f32 %v177, 0.0
    %v192 = vmax.f32 %v180, 0.0
    %v193 = vmax.f32 %v185, 0.0
    %v194 = vmax.f32 %v188, 0.0
    %s195 = scalar_lea.vmem %s0, 4
    %v196 = vld [vmem:[%s195] sm:$0xf]
    %v198 = vand.u32 %v196, %v49
    %200 = vmatprep.subr.bf16.mxu0 0
    %201 = vmatpush1.bf16.msra.mxu0 %v198
    %202 = vmatprep.subr.bf16.mxu0 0
    %203 = vmatpush1.bf16.msra.mxu0 0
    %204 = vmatprep.subr.bf16.mxu0 0
    %205 = vmatpush1.bf16.msra.mxu0 0
    %206 = vmatprep.subr.bf16.mxu0 0
    %207 = vmatpush1.bf16.msra.mxu0 0
    %208 = vmatprep.subr.bf16.mxu0 0
    %209 = vmatpush1.bf16.msra.mxu0 0
    %210 = vmatprep.subr.bf16.mxu0 0
    %211 = vmatpush1.bf16.msra.mxu0 0
    %212 = vmatprep.subr.bf16.mxu0 0
    %213 = vmatpush1.bf16.msra.mxu0 0
    %214 = vmatprep.subr.bf16.mxu0 0
    %215 = vmatpush1.bf16.msra.mxu0 0
    %216 = vmatprep.subr.bf16.mxu0 0
    %217 = vmatpush1.bf16.msra.mxu0 0
    %218 = vmatprep.subr.bf16.mxu0 0
    %219 = vmatpush1.bf16.msra.mxu0 0
    %220 = vmatprep.subr.bf16.mxu0 0
    %221 = vmatpush1.bf16.msra.mxu0 0
    %222 = vmatprep.subr.bf16.mxu0 0
    %223 = vmatpush1.bf16.msra.mxu0 0
    %224 = vmatprep.subr.bf16.mxu0 0
    %225 = vmatpush1.bf16.msra.mxu0 0
    %226 = vmatprep.subr.bf16.mxu0 0
    %227 = vmatpush1.bf16.msra.mxu0 0
    %228 = vmatprep.subr.bf16.mxu0 0
    %229 = vmatpush1.bf16.msra.mxu0 0
    %230 = vmatprep.subr.bf16.mxu0 0
    %231 = vmatpush1.bf16.msra.mxu0 0
    %232 = vmatprep.mubr.bf16.mxu0 0
    %233 = vmatmul.mubr.bf16.gmra.mrb[0].mxu0 %v44
    %v234 = vpop.f32.mrb[0].mxu0
    %v235 = vadd.f32 %v30, %v234
    %v236 = vpop.f32.mrb[0].mxu0
    %v237 = vpop.f32.mrb[0].mxu0
    %v238 = vadd.f32 %v35, %v237
    %v239 = vpop.f32.mrb[0].mxu0
    %240 = vdwg.mxu0
    %v241 = vmax.f32 %v235, 0.0
    %v242 = vmax.f32 %v238, 0.0
    %v243 = vpack.c.bf16 %v242, %v241
    %244 = vmatprep.subr.bf16.mxu0 0
    %245 = vmatpush1.bf16.msra.mxu0 %v243
    %246 = vmatprep.subr.bf16.mxu0 0
    %247 = vmatpush1.bf16.msra.mxu0 0
    %248 = vmatprep.subr.bf16.mxu0 0
    %249 = vmatpush1.bf16.msra.mxu0 0
    %250 = vmatprep.subr.bf16.mxu0 0
    %251 = vmatpush1.bf16.msra.mxu0 0
    %252 = vmatprep.subr.bf16.mxu0 0
    %253 = vmatpush1.bf16.msra.mxu0 0
    %254 = vmatprep.subr.bf16.mxu0 0
    %255 = vmatpush1.bf16.msra.mxu0 0
    %256 = vmatprep.subr.bf16.mxu0 0
    %257 = vmatpush1.bf16.msra.mxu0 0
    %258 = vmatprep.subr.bf16.mxu0 0
    %259 = vmatpush1.bf16.msra.mxu0 0
    %260 = vmatprep.subr.bf16.mxu0 0
    %261 = vmatpush1.bf16.msra.mxu0 0
    %262 = vmatprep.subr.bf16.mxu0 0
    %263 = vmatpush1.bf16.msra.mxu0 0
    %264 = vmatprep.subr.bf16.mxu0 0
    %265 = vmatpush1.bf16.msra.mxu0 0
    %266 = vmatprep.subr.bf16.mxu0 0
    %267 = vmatpush1.bf16.msra.mxu0 0
    %268 = vmatprep.subr.bf16.mxu0 0
    %269 = vmatpush1.bf16.msra.mxu0 0
    %270 = vmatprep.subr.bf16.mxu0 0
    %271 = vmatpush1.bf16.msra.mxu0 0
    %272 = vmatprep.subr.bf16.mxu0 0
    %273 = vmatpush1.bf16.msra.mxu0 0
    %274 = vmatprep.subr.bf16.mxu0 0
    %275 = vmatpush1.bf16.msra.mxu0 0
    %276 = vmatprep.mubr.bf16.mxu0 0
    %277 = vmatmul.mubr.bf16.gmra.mrb[0].mxu0 %v137
    %v278 = vpop.f32.mrb[0].mxu0
    %v279 = vadd.f32 %v108, %v278
    %v280 = vpop.f32.mrb[0].mxu0
    %v281 = vpop.f32.mrb[0].mxu0
    %v282 = vadd.f32 %v113, %v281
    %v283 = vpop.f32.mrb[0].mxu0
    %284 = vmatprep.mubr.bf16.mxu0 0
    %285 = vmatmul.mubr.bf16.gmra.mrb[0].mxu0 %v140
    %v286 = vpop.f32.mrb[0].mxu0
    %v287 = vadd.f32 %v118, %v286
    %v288 = vpop.f32.mrb[0].mxu0
    %v289 = vpop.f32.mrb[0].mxu0
    %v290 = vadd.f32 %v123, %v289
    %v291 = vpop.f32.mrb[0].mxu0
    %292 = vdwg.mxu0
    %v293 = vmax.f32 %v279, 0.0
    %v294 = vmax.f32 %v282, 0.0
    %v295 = vmax.f32 %v287, 0.0
    %v296 = vmax.f32 %v290, 0.0
    %v297 = vmax.f32 %v191, %v293
    %v298 = vmax.f32 %v192, %v294
    %v299 = vmax.f32 %v193, %v295
    %v300 = vmax.f32 %v194, %v296
    %s301 = scalar_lea.vmem %s0, 8
    %v302 = vld [vmem:[%s301] sm:$0xf]
    %v304 = vand.u32 %v302, %v49
    %306 = vmatprep.subr.bf16.mxu0 0
    %307 = vmatpush1.bf16.msra.mxu0 %v304
    %308 = vmatprep.subr.bf16.mxu0 0
    %309 = vmatpush1.bf16.msra.mxu0 0
    %310 = vmatprep.subr.bf16.mxu0 0
    %311 = vmatpush1.bf16.msra.mxu0 0
    %312 = vmatprep.subr.bf16.mxu0 0
    %313 = vmatpush1.bf16.msra.mxu0 0
    %314 = vmatprep.subr.bf16.mxu0 0
    %315 = vmatpush1.bf16.msra.mxu0 0
    %316 = vmatprep.subr.bf16.mxu0 0
    %317 = vmatpush1.bf16.msra.mxu0 0
    %318 = vmatprep.subr.bf16.mxu0 0
    %319 = vmatpush1.bf16.msra.mxu0 0
    %320 = vmatprep.subr.bf16.mxu0 0
    %321 = vmatpush1.bf16.msra.mxu0 0
    %322 = vmatprep.subr.bf16.mxu0 0
    %323 = vmatpush1.bf16.msra.mxu0 0
    %324 = vmatprep.subr.bf16.mxu0 0
    %325 = vmatpush1.bf16.msra.mxu0 0
    %326 = vmatprep.subr.bf16.mxu0 0
    %327 = vmatpush1.bf16.msra.mxu0 0
    %328 = vmatprep.subr.bf16.mxu0 0
    %329 = vmatpush1.bf16.msra.mxu0 0
    %330 = vmatprep.subr.bf16.mxu0 0
    %331 = vmatpush1.bf16.msra.mxu0 0
    %332 = vmatprep.subr.bf16.mxu0 0
    %333 = vmatpush1.bf16.msra.mxu0 0
    %334 = vmatprep.subr.bf16.mxu0 0
    %335 = vmatpush1.bf16.msra.mxu0 0
    %336 = vmatprep.subr.bf16.mxu0 0
    %337 = vmatpush1.bf16.msra.mxu0 0
    %338 = vmatprep.mubr.bf16.mxu0 0
    %339 = vmatmul.mubr.bf16.gmra.mrb[0].mxu0 %v44
    %v340 = vpop.f32.mrb[0].mxu0
    %v341 = vadd.f32 %v30, %v340
    %v342 = vpop.f32.mrb[0].mxu0
    %v343 = vpop.f32.mrb[0].mxu0
    %v344 = vadd.f32 %v35, %v343
    %v345 = vpop.f32.mrb[0].mxu0
    %346 = vdwg.mxu0
    %v347 = vmax.f32 %v341, 0.0
    %v348 = vmax.f32 %v344, 0.0
    %v349 = vpack.c.bf16 %v348, %v347
    %350 = vmatprep.subr.bf16.mxu0 0
    %351 = vmatpush1.bf16.msra.mxu0 %v349
    %352 = vmatprep.subr.bf16.mxu0 0
    %353 = vmatpush1.bf16.msra.mxu0 0
    %354 = vmatprep.subr.bf16.mxu0 0
    %355 = vmatpush1.bf16.msra.mxu0 0
    %356 = vmatprep.subr.bf16.mxu0 0
    %357 = vmatpush1.bf16.msra.mxu0 0
    %358 = vmatprep.subr.bf16.mxu0 0
    %359 = vmatpush1.bf16.msra.mxu0 0
    %360 = vmatprep.subr.bf16.mxu0 0
    %361 = vmatpush1.bf16.msra.mxu0 0
    %362 = vmatprep.subr.bf16.mxu0 0
    %363 = vmatpush1.bf16.msra.mxu0 0
    %364 = vmatprep.subr.bf16.mxu0 0
    %365 = vmatpush1.bf16.msra.mxu0 0
    %366 = vmatprep.subr.bf16.mxu0 0
    %367 = vmatpush1.bf16.msra.mxu0 0
    %368 = vmatprep.subr.bf16.mxu0 0
    %369 = vmatpush1.bf16.msra.mxu0 0
    %370 = vmatprep.subr.bf16.mxu0 0
    %371 = vmatpush1.bf16.msra.mxu0 0
    %372 = vmatprep.subr.bf16.mxu0 0
    %373 = vmatpush1.bf16.msra.mxu0 0
    %374 = vmatprep.subr.bf16.mxu0 0
    %375 = vmatpush1.bf16.msra.mxu0 0
    %376 = vmatprep.subr.bf16.mxu0 0
    %377 = vmatpush1.bf16.msra.mxu0 0
    %378 = vmatprep.subr.bf16.mxu0 0
    %379 = vmatpush1.bf16.msra.mxu0 0
    %380 = vmatprep.subr.bf16.mxu0 0
    %381 = vmatpush1.bf16.msra.mxu0 0
    %382 = vmatprep.mubr.bf16.mxu0 0
    %383 = vmatmul.mubr.bf16.gmra.mrb[0].mxu0 %v137
    %v384 = vpop.f32.mrb[0].mxu0
    %v385 = vadd.f32 %v108, %v384
    %v386 = vpop.f32.mrb[0].mxu0
    %v387 = vpop.f32.mrb[0].mxu0
    %v388 = vadd.f32 %v113, %v387
    %v389 = vpop.f32.mrb[0].mxu0
    %390 = vmatprep.mubr.bf16.mxu0 0
    %391 = vmatmul.mubr.bf16.gmra.mrb[0].mxu0 %v140
    %v392 = vpop.f32.mrb[0].mxu0
    %v393 = vadd.f32 %v118, %v392
    %v394 = vpop.f32.mrb[0].mxu0
    %v395 = vpop.f32.mrb[0].mxu0
    %v396 = vadd.f32 %v123, %v395
    %v397 = vpop.f32.mrb[0].mxu0
    %398 = vdwg.mxu0
    %v399 = vmax.f32 %v385, 0.0
    %v400 = vmax.f32 %v388, 0.0
    %v401 = vmax.f32 %v393, 0.0
    %v402 = vmax.f32 %v396, 0.0
    %v403 = vmax.f32 %v297, %v399
    %v404 = vmax.f32 %v298, %v400
    %v405 = vmax.f32 %v299, %v401
    %v406 = vmax.f32 %v300, %v402
    %s407 = scalar_lea.vmem %s0, 12
    %v408 = vld [vmem:[%s407] sm:$0xf]
    %v410 = vand.u32 %v408, %v49
    %412 = vmatprep.subr.bf16.mxu0 0
    %413 = vmatpush1.bf16.msra.mxu0 %v410
    %414 = vmatprep.subr.bf16.mxu0 0
    %415 = vmatpush1.bf16.msra.mxu0 0
    %416 = vmatprep.subr.bf16.mxu0 0
    %417 = vmatpush1.bf16.msra.mxu0 0
    %418 = vmatprep.subr.bf16.mxu0 0
    %419 = vmatpush1.bf16.msra.mxu0 0
    %420 = vmatprep.subr.bf16.mxu0 0
    %421 = vmatpush1.bf16.msra.mxu0 0
    %422 = vmatprep.subr.bf16.mxu0 0
    %423 = vmatpush1.bf16.msra.mxu0 0
    %424 = vmatprep.subr.bf16.mxu0 0
    %425 = vmatpush1.bf16.msra.mxu0 0
    %426 = vmatprep.subr.bf16.mxu0 0
    %427 = vmatpush1.bf16.msra.mxu0 0
    %428 = vmatprep.subr.bf16.mxu0 0
    %429 = vmatpush1.bf16.msra.mxu0 0
    %430 = vmatprep.subr.bf16.mxu0 0
    %431 = vmatpush1.bf16.msra.mxu0 0
    %432 = vmatprep.subr.bf16.mxu0 0
    %433 = vmatpush1.bf16.msra.mxu0 0
    %434 = vmatprep.subr.bf16.mxu0 0
    %435 = vmatpush1.bf16.msra.mxu0 0
    %436 = vmatprep.subr.bf16.mxu0 0
    %437 = vmatpush1.bf16.msra.mxu0 0
    %438 = vmatprep.subr.bf16.mxu0 0
    %439 = vmatpush1.bf16.msra.mxu0 0
    %440 = vmatprep.subr.bf16.mxu0 0
    %441 = vmatpush1.bf16.msra.mxu0 0
    %442 = vmatprep.subr.bf16.mxu0 0
    %443 = vmatpush1.bf16.msra.mxu0 0
    %444 = vmatprep.mubr.bf16.mxu0 0
    %445 = vmatmul.mubr.bf16.gmra.mrb[0].mxu0 %v44
    %v446 = vpop.f32.mrb[0].mxu0
    %v447 = vadd.f32 %v30, %v446
    %v448 = vpop.f32.mrb[0].mxu0
    %v449 = vpop.f32.mrb[0].mxu0
    %v450 = vadd.f32 %v35, %v449
    %v451 = vpop.f32.mrb[0].mxu0
    %452 = vdwg.mxu0
    %v453 = vmax.f32 %v447, 0.0
    %v454 = vmax.f32 %v450, 0.0
    %v455 = vpack.c.bf16 %v454, %v453
    %456 = vmatprep.subr.bf16.mxu0 0
    %457 = vmatpush1.bf16.msra.mxu0 %v455
    %458 = vmatprep.subr.bf16.mxu0 0
    %459 = vmatpush1.bf16.msra.mxu0 0
    %460 = vmatprep.subr.bf16.mxu0 0
    %461 = vmatpush1.bf16.msra.mxu0 0
    %462 = vmatprep.subr.bf16.mxu0 0
    %463 = vmatpush1.bf16.msra.mxu0 0
    %464 = vmatprep.subr.bf16.mxu0 0
    %465 = vmatpush1.bf16.msra.mxu0 0
    %466 = vmatprep.subr.bf16.mxu0 0
    %467 = vmatpush1.bf16.msra.mxu0 0
    %468 = vmatprep.subr.bf16.mxu0 0
    %469 = vmatpush1.bf16.msra.mxu0 0
    %470 = vmatprep.subr.bf16.mxu0 0
    %471 = vmatpush1.bf16.msra.mxu0 0
    %472 = vmatprep.subr.bf16.mxu0 0
    %473 = vmatpush1.bf16.msra.mxu0 0
    %474 = vmatprep.subr.bf16.mxu0 0
    %475 = vmatpush1.bf16.msra.mxu0 0
    %476 = vmatprep.subr.bf16.mxu0 0
    %477 = vmatpush1.bf16.msra.mxu0 0
    %478 = vmatprep.subr.bf16.mxu0 0
    %479 = vmatpush1.bf16.msra.mxu0 0
    %480 = vmatprep.subr.bf16.mxu0 0
    %481 = vmatpush1.bf16.msra.mxu0 0
    %482 = vmatprep.subr.bf16.mxu0 0
    %483 = vmatpush1.bf16.msra.mxu0 0
    %484 = vmatprep.subr.bf16.mxu0 0
    %485 = vmatpush1.bf16.msra.mxu0 0
    %486 = vmatprep.subr.bf16.mxu0 0
    %487 = vmatpush1.bf16.msra.mxu0 0
    %488 = vmatprep.mubr.bf16.mxu0 0
    %489 = vmatmul.mubr.bf16.gmra.mrb[0].mxu0 %v137
    %v490 = vpop.f32.mrb[0].mxu0
    %v491 = vadd.f32 %v108, %v490
    %v492 = vpop.f32.mrb[0].mxu0
    %v493 = vpop.f32.mrb[0].mxu0
    %v494 = vadd.f32 %v113, %v493
    %v495 = vpop.f32.mrb[0].mxu0
    %496 = vmatprep.mubr.bf16.mxu0 0
    %497 = vmatmul.mubr.bf16.gmra.mrb[0].mxu0 %v140
    %v498 = vpop.f32.mrb[0].mxu0
    %v499 = vadd.f32 %v118, %v498
    %v500 = vpop.f32.mrb[0].mxu0
    %v501 = vpop.f32.mrb[0].mxu0
    %v502 = vadd.f32 %v123, %v501
    %v503 = vpop.f32.mrb[0].mxu0
    %504 = vdwg.mxu0
    %v505 = vmax.f32 %v491, 0.0
    %v506 = vmax.f32 %v494, 0.0
    %v507 = vmax.f32 %v499, 0.0
    %v508 = vmax.f32 %v502, 0.0
    %v509 = vmax.f32 %v403, %v505
    %v510 = vmax.f32 %v404, %v506
    %v511 = vmax.f32 %v405, %v507
    %v512 = vmax.f32 %v406, %v508
    %s513 = scalar_lea.vmem %s0, 16
    %v514 = vld [vmem:[%s513] sm:$0xf]
    %v516 = vand.u32 %v514, %v49
    %518 = vmatprep.subr.bf16.mxu0 0
    %519 = vmatpush1.bf16.msra.mxu0 %v516
    %520 = vmatprep.subr.bf16.mxu0 0
    %521 = vmatpush1.bf16.msra.mxu0 0
    %522 = vmatprep.subr.bf16.mxu0 0
    %523 = vmatpush1.bf16.msra.mxu0 0
    %524 = vmatprep.subr.bf16.mxu0 0
    %525 = vmatpush1.bf16.msra.mxu0 0
    %526 = vmatprep.subr.bf16.mxu0 0
    %527 = vmatpush1.bf16.msra.mxu0 0
    %528 = vmatprep.subr.bf16.mxu0 0
    %529 = vmatpush1.bf16.msra.mxu0 0
    %530 = vmatprep.subr.bf16.mxu0 0
    %531 = vmatpush1.bf16.msra.mxu0 0
    %532 = vmatprep.subr.bf16.mxu0 0
    %533 = vmatpush1.bf16.msra.mxu0 0
    %534 = vmatprep.subr.bf16.mxu0 0
    %535 = vmatpush1.bf16.msra.mxu0 0
    %536 = vmatprep.subr.bf16.mxu0 0
    %537 = vmatpush1.bf16.msra.mxu0 0
    %538 = vmatprep.subr.bf16.mxu0 0
    %539 = vmatpush1.bf16.msra.mxu0 0
    %540 = vmatprep.subr.bf16.mxu0 0
    %541 = vmatpush1.bf16.msra.mxu0 0
    %542 = vmatprep.subr.bf16.mxu0 0
    %543 = vmatpush1.bf16.msra.mxu0 0
    %544 = vmatprep.subr.bf16.mxu0 0
    %545 = vmatpush1.bf16.msra.mxu0 0
    %546 = vmatprep.subr.bf16.mxu0 0
    %547 = vmatpush1.bf16.msra.mxu0 0
    %548 = vmatprep.subr.bf16.mxu0 0
    %549 = vmatpush1.bf16.msra.mxu0 0
    %550 = vmatprep.mubr.bf16.mxu0 0
    %551 = vmatmul.mubr.bf16.gmra.mrb[0].mxu0 %v44
    %v552 = vpop.f32.mrb[0].mxu0
    %v553 = vadd.f32 %v30, %v552
    %v554 = vpop.f32.mrb[0].mxu0
    %v555 = vpop.f32.mrb[0].mxu0
    %v556 = vadd.f32 %v35, %v555
    %v557 = vpop.f32.mrb[0].mxu0
    %558 = vdwg.mxu0
    %v559 = vmax.f32 %v553, 0.0
    %v560 = vmax.f32 %v556, 0.0
    %v561 = vpack.c.bf16 %v560, %v559
    %562 = vmatprep.subr.bf16.mxu0 0
    %563 = vmatpush1.bf16.msra.mxu0 %v561
    %564 = vmatprep.subr.bf16.mxu0 0
    %565 = vmatpush1.bf16.msra.mxu0 0
    %566 = vmatprep.subr.bf16.mxu0 0
    %567 = vmatpush1.bf16.msra.mxu0 0
    %568 = vmatprep.subr.bf16.mxu0 0
    %569 = vmatpush1.bf16.msra.mxu0 0
    %570 = vmatprep.subr.bf16.mxu0 0
    %571 = vmatpush1.bf16.msra.mxu0 0
    %572 = vmatprep.subr.bf16.mxu0 0
    %573 = vmatpush1.bf16.msra.mxu0 0
    %574 = vmatprep.subr.bf16.mxu0 0
    %575 = vmatpush1.bf16.msra.mxu0 0
    %576 = vmatprep.subr.bf16.mxu0 0
    %577 = vmatpush1.bf16.msra.mxu0 0
    %578 = vmatprep.subr.bf16.mxu0 0
    %579 = vmatpush1.bf16.msra.mxu0 0
    %580 = vmatprep.subr.bf16.mxu0 0
    %581 = vmatpush1.bf16.msra.mxu0 0
    %582 = vmatprep.subr.bf16.mxu0 0
    %583 = vmatpush1.bf16.msra.mxu0 0
    %584 = vmatprep.subr.bf16.mxu0 0
    %585 = vmatpush1.bf16.msra.mxu0 0
    %586 = vmatprep.subr.bf16.mxu0 0
    %587 = vmatpush1.bf16.msra.mxu0 0
    %588 = vmatprep.subr.bf16.mxu0 0
    %589 = vmatpush1.bf16.msra.mxu0 0
    %590 = vmatprep.subr.bf16.mxu0 0
    %591 = vmatpush1.bf16.msra.mxu0 0
    %592 = vmatprep.subr.bf16.mxu0 0
    %593 = vmatpush1.bf16.msra.mxu0 0
    %594 = vmatprep.mubr.bf16.mxu0 0
    %595 = vmatmul.mubr.bf16.gmra.mrb[0].mxu0 %v137
    %v596 = vpop.f32.mrb[0].mxu0
    %v597 = vadd.f32 %v108, %v596
    %v598 = vpop.f32.mrb[0].mxu0
    %v599 = vpop.f32.mrb[0].mxu0
    %v600 = vadd.f32 %v113, %v599
    %v601 = vpop.f32.mrb[0].mxu0
    %602 = vmatprep.mubr.bf16.mxu0 0
    %603 = vmatmul.mubr.bf16.gmra.mrb[0].mxu0 %v140
    %v604 = vpop.f32.mrb[0].mxu0
    %v605 = vadd.f32 %v118, %v604
    %v606 = vpop.f32.mrb[0].mxu0
    %v607 = vpop.f32.mrb[0].mxu0
    %v608 = vadd.f32 %v123, %v607
    %v609 = vpop.f32.mrb[0].mxu0
    %610 = vdwg.mxu0
    %v611 = vmax.f32 %v597, 0.0
    %v612 = vmax.f32 %v600, 0.0
    %v613 = vmax.f32 %v605, 0.0
    %v614 = vmax.f32 %v608, 0.0
    %v615 = vmax.f32 %v509, %v611
    %v616 = vmax.f32 %v510, %v612
    %v617 = vmax.f32 %v511, %v613
    %v618 = vmax.f32 %v512, %v614
    %s619 = scalar_lea.vmem %s0, 20
    %v620 = vld [vmem:[%s619] sm:$0xf]
    %v622 = vand.u32 %v620, %v49
    %624 = vmatprep.subr.bf16.mxu0 0
    %625 = vmatpush1.bf16.msra.mxu0 %v622
    %626 = vmatprep.subr.bf16.mxu0 0
    %627 = vmatpush1.bf16.msra.mxu0 0
    %628 = vmatprep.subr.bf16.mxu0 0
    %629 = vmatpush1.bf16.msra.mxu0 0
    %630 = vmatprep.subr.bf16.mxu0 0
    %631 = vmatpush1.bf16.msra.mxu0 0
    %632 = vmatprep.subr.bf16.mxu0 0
    %633 = vmatpush1.bf16.msra.mxu0 0
    %634 = vmatprep.subr.bf16.mxu0 0
    %635 = vmatpush1.bf16.msra.mxu0 0
    %636 = vmatprep.subr.bf16.mxu0 0
    %637 = vmatpush1.bf16.msra.mxu0 0
    %638 = vmatprep.subr.bf16.mxu0 0
    %639 = vmatpush1.bf16.msra.mxu0 0
    %640 = vmatprep.subr.bf16.mxu0 0
    %641 = vmatpush1.bf16.msra.mxu0 0
    %642 = vmatprep.subr.bf16.mxu0 0
    %643 = vmatpush1.bf16.msra.mxu0 0
    %644 = vmatprep.subr.bf16.mxu0 0
    %645 = vmatpush1.bf16.msra.mxu0 0
    %646 = vmatprep.subr.bf16.mxu0 0
    %647 = vmatpush1.bf16.msra.mxu0 0
    %648 = vmatprep.subr.bf16.mxu0 0
    %649 = vmatpush1.bf16.msra.mxu0 0
    %650 = vmatprep.subr.bf16.mxu0 0
    %651 = vmatpush1.bf16.msra.mxu0 0
    %652 = vmatprep.subr.bf16.mxu0 0
    %653 = vmatpush1.bf16.msra.mxu0 0
    %654 = vmatprep.subr.bf16.mxu0 0
    %655 = vmatpush1.bf16.msra.mxu0 0
    %656 = vmatprep.mubr.bf16.mxu0 0
    %657 = vmatmul.mubr.bf16.gmra.mrb[0].mxu0 %v44
    %v658 = vpop.f32.mrb[0].mxu0
    %v659 = vadd.f32 %v30, %v658
    %v660 = vpop.f32.mrb[0].mxu0
    %v661 = vpop.f32.mrb[0].mxu0
    %v662 = vadd.f32 %v35, %v661
    %v663 = vpop.f32.mrb[0].mxu0
    %664 = vdwg.mxu0
    %v665 = vmax.f32 %v659, 0.0
    %v666 = vmax.f32 %v662, 0.0
    %v667 = vpack.c.bf16 %v666, %v665
    %668 = vmatprep.subr.bf16.mxu0 0
    %669 = vmatpush1.bf16.msra.mxu0 %v667
    %670 = vmatprep.subr.bf16.mxu0 0
    %671 = vmatpush1.bf16.msra.mxu0 0
    %672 = vmatprep.subr.bf16.mxu0 0
    %673 = vmatpush1.bf16.msra.mxu0 0
    %674 = vmatprep.subr.bf16.mxu0 0
    %675 = vmatpush1.bf16.msra.mxu0 0
    %676 = vmatprep.subr.bf16.mxu0 0
    %677 = vmatpush1.bf16.msra.mxu0 0
    %678 = vmatprep.subr.bf16.mxu0 0
    %679 = vmatpush1.bf16.msra.mxu0 0
    %680 = vmatprep.subr.bf16.mxu0 0
    %681 = vmatpush1.bf16.msra.mxu0 0
    %682 = vmatprep.subr.bf16.mxu0 0
    %683 = vmatpush1.bf16.msra.mxu0 0
    %684 = vmatprep.subr.bf16.mxu0 0
    %685 = vmatpush1.bf16.msra.mxu0 0
    %686 = vmatprep.subr.bf16.mxu0 0
    %687 = vmatpush1.bf16.msra.mxu0 0
    %688 = vmatprep.subr.bf16.mxu0 0
    %689 = vmatpush1.bf16.msra.mxu0 0
    %690 = vmatprep.subr.bf16.mxu0 0
    %691 = vmatpush1.bf16.msra.mxu0 0
    %692 = vmatprep.subr.bf16.mxu0 0
    %693 = vmatpush1.bf16.msra.mxu0 0
    %694 = vmatprep.subr.bf16.mxu0 0
    %695 = vmatpush1.bf16.msra.mxu0 0
    %696 = vmatprep.subr.bf16.mxu0 0
    %697 = vmatpush1.bf16.msra.mxu0 0
    %698 = vmatprep.subr.bf16.mxu0 0
    %699 = vmatpush1.bf16.msra.mxu0 0
    %700 = vmatprep.mubr.bf16.mxu0 0
    %701 = vmatmul.mubr.bf16.gmra.mrb[0].mxu0 %v137
    %v702 = vpop.f32.mrb[0].mxu0
    %v703 = vadd.f32 %v108, %v702
    %v704 = vpop.f32.mrb[0].mxu0
    %v705 = vpop.f32.mrb[0].mxu0
    %v706 = vadd.f32 %v113, %v705
    %v707 = vpop.f32.mrb[0].mxu0
    %708 = vmatprep.mubr.bf16.mxu0 0
    %709 = vmatmul.mubr.bf16.gmra.mrb[0].mxu0 %v140
    %v710 = vpop.f32.mrb[0].mxu0
    %v711 = vadd.f32 %v118, %v710
    %v712 = vpop.f32.mrb[0].mxu0
    %v713 = vpop.f32.mrb[0].mxu0
    %v714 = vadd.f32 %v123, %v713
    %v715 = vpop.f32.mrb[0].mxu0
    %716 = vdwg.mxu0
    %v717 = vmax.f32 %v703, 0.0
    %v718 = vmax.f32 %v706, 0.0
    %v719 = vmax.f32 %v711, 0.0
    %v720 = vmax.f32 %v714, 0.0
    %v721 = vmax.f32 %v615, %v717
    %v722 = vmax.f32 %v616, %v718
    %v723 = vmax.f32 %v617, %v719
    %v724 = vmax.f32 %v618, %v720
    %s725 = scalar_lea.vmem %s0, 24
    %v726 = vld [vmem:[%s725] sm:$0xf]
    %v728 = vand.u32 %v726, %v49
    %730 = vmatprep.subr.bf16.mxu0 0
    %731 = vmatpush1.bf16.msra.mxu0 %v728
    %732 = vmatprep.subr.bf16.mxu0 0
    %733 = vmatpush1.bf16.msra.mxu0 0
    %734 = vmatprep.subr.bf16.mxu0 0
    %735 = vmatpush1.bf16.msra.mxu0 0
    %736 = vmatprep.subr.bf16.mxu0 0
    %737 = vmatpush1.bf16.msra.mxu0 0
    %738 = vmatprep.subr.bf16.mxu0 0
    %739 = vmatpush1.bf16.msra.mxu0 0
    %740 = vmatprep.subr.bf16.mxu0 0
    %741 = vmatpush1.bf16.msra.mxu0 0
    %742 = vmatprep.subr.bf16.mxu0 0
    %743 = vmatpush1.bf16.msra.mxu0 0
    %744 = vmatprep.subr.bf16.mxu0 0
    %745 = vmatpush1.bf16.msra.mxu0 0
    %746 = vmatprep.subr.bf16.mxu0 0
    %747 = vmatpush1.bf16.msra.mxu0 0
    %748 = vmatprep.subr.bf16.mxu0 0
    %749 = vmatpush1.bf16.msra.mxu0 0
    %750 = vmatprep.subr.bf16.mxu0 0
    %751 = vmatpush1.bf16.msra.mxu0 0
    %752 = vmatprep.subr.bf16.mxu0 0
    %753 = vmatpush1.bf16.msra.mxu0 0
    %754 = vmatprep.subr.bf16.mxu0 0
    %755 = vmatpush1.bf16.msra.mxu0 0
    %756 = vmatprep.subr.bf16.mxu0 0
    %757 = vmatpush1.bf16.msra.mxu0 0
    %758 = vmatprep.subr.bf16.mxu0 0
    %759 = vmatpush1.bf16.msra.mxu0 0
    %760 = vmatprep.subr.bf16.mxu0 0
    %761 = vmatpush1.bf16.msra.mxu0 0
    %762 = vmatprep.mubr.bf16.mxu0 0
    %763 = vmatmul.mubr.bf16.gmra.mrb[0].mxu0 %v44
    %v764 = vpop.f32.mrb[0].mxu0
    %v765 = vadd.f32 %v30, %v764
    %v766 = vpop.f32.mrb[0].mxu0
    %v767 = vpop.f32.mrb[0].mxu0
    %v768 = vadd.f32 %v35, %v767
    %v769 = vpop.f32.mrb[0].mxu0
    %770 = vdwg.mxu0
    %v771 = vmax.f32 %v765, 0.0
    %v772 = vmax.f32 %v768, 0.0
    %v773 = vpack.c.bf16 %v772, %v771
    %774 = vmatprep.subr.bf16.mxu0 0
    %775 = vmatpush1.bf16.msra.mxu0 %v773
    %776 = vmatprep.subr.bf16.mxu0 0
    %777 = vmatpush1.bf16.msra.mxu0 0
    %778 = vmatprep.subr.bf16.mxu0 0
    %779 = vmatpush1.bf16.msra.mxu0 0
    %780 = vmatprep.subr.bf16.mxu0 0
    %781 = vmatpush1.bf16.msra.mxu0 0
    %782 = vmatprep.subr.bf16.mxu0 0
    %783 = vmatpush1.bf16.msra.mxu0 0
    %784 = vmatprep.subr.bf16.mxu0 0
    %785 = vmatpush1.bf16.msra.mxu0 0
    %786 = vmatprep.subr.bf16.mxu0 0
    %787 = vmatpush1.bf16.msra.mxu0 0
    %788 = vmatprep.subr.bf16.mxu0 0
    %789 = vmatpush1.bf16.msra.mxu0 0
    %790 = vmatprep.subr.bf16.mxu0 0
    %791 = vmatpush1.bf16.msra.mxu0 0
    %792 = vmatprep.subr.bf16.mxu0 0
    %793 = vmatpush1.bf16.msra.mxu0 0
    %794 = vmatprep.subr.bf16.mxu0 0
    %795 = vmatpush1.bf16.msra.mxu0 0
    %796 = vmatprep.subr.bf16.mxu0 0
    %797 = vmatpush1.bf16.msra.mxu0 0
    %798 = vmatprep.subr.bf16.mxu0 0
    %799 = vmatpush1.bf16.msra.mxu0 0
    %800 = vmatprep.subr.bf16.mxu0 0
    %801 = vmatpush1.bf16.msra.mxu0 0
    %802 = vmatprep.subr.bf16.mxu0 0
    %803 = vmatpush1.bf16.msra.mxu0 0
    %804 = vmatprep.subr.bf16.mxu0 0
    %805 = vmatpush1.bf16.msra.mxu0 0
    %806 = vmatprep.mubr.bf16.mxu0 0
    %807 = vmatmul.mubr.bf16.gmra.mrb[0].mxu0 %v137
    %v808 = vpop.f32.mrb[0].mxu0
    %v809 = vadd.f32 %v108, %v808
    %v810 = vpop.f32.mrb[0].mxu0
    %v811 = vpop.f32.mrb[0].mxu0
    %v812 = vadd.f32 %v113, %v811
    %v813 = vpop.f32.mrb[0].mxu0
    %814 = vmatprep.mubr.bf16.mxu0 0
    %815 = vmatmul.mubr.bf16.gmra.mrb[0].mxu0 %v140
    %v816 = vpop.f32.mrb[0].mxu0
    %v817 = vadd.f32 %v118, %v816
    %v818 = vpop.f32.mrb[0].mxu0
    %v819 = vpop.f32.mrb[0].mxu0
    %v820 = vadd.f32 %v123, %v819
    %v821 = vpop.f32.mrb[0].mxu0
    %822 = vdwg.mxu0
    %v823 = vmax.f32 %v809, 0.0
    %v824 = vmax.f32 %v812, 0.0
    %v825 = vmax.f32 %v817, 0.0
    %v826 = vmax.f32 %v820, 0.0
    %v827 = vmax.f32 %v721, %v823
    %v828 = vmax.f32 %v722, %v824
    %v829 = vmax.f32 %v723, %v825
    %v830 = vmax.f32 %v724, %v826
    %s831 = scalar_lea.vmem %s0, 28
    %v832 = vld [vmem:[%s831] sm:$0xf]
    %v834 = vand.u32 %v832, %v49
    %836 = vmatprep.subr.bf16.mxu0 0
    %837 = vmatpush1.bf16.msra.mxu0 %v834
    %838 = vmatprep.subr.bf16.mxu0 0
    %839 = vmatpush1.bf16.msra.mxu0 0
    %840 = vmatprep.subr.bf16.mxu0 0
    %841 = vmatpush1.bf16.msra.mxu0 0
    %842 = vmatprep.subr.bf16.mxu0 0
    %843 = vmatpush1.bf16.msra.mxu0 0
    %844 = vmatprep.subr.bf16.mxu0 0
    %845 = vmatpush1.bf16.msra.mxu0 0
    %846 = vmatprep.subr.bf16.mxu0 0
    %847 = vmatpush1.bf16.msra.mxu0 0
    %848 = vmatprep.subr.bf16.mxu0 0
    %849 = vmatpush1.bf16.msra.mxu0 0
    %850 = vmatprep.subr.bf16.mxu0 0
    %851 = vmatpush1.bf16.msra.mxu0 0
    %852 = vmatprep.subr.bf16.mxu0 0
    %853 = vmatpush1.bf16.msra.mxu0 0
    %854 = vmatprep.subr.bf16.mxu0 0
    %855 = vmatpush1.bf16.msra.mxu0 0
    %856 = vmatprep.subr.bf16.mxu0 0
    %857 = vmatpush1.bf16.msra.mxu0 0
    %858 = vmatprep.subr.bf16.mxu0 0
    %859 = vmatpush1.bf16.msra.mxu0 0
    %860 = vmatprep.subr.bf16.mxu0 0
    %861 = vmatpush1.bf16.msra.mxu0 0
    %862 = vmatprep.subr.bf16.mxu0 0
    %863 = vmatpush1.bf16.msra.mxu0 0
    %864 = vmatprep.subr.bf16.mxu0 0
    %865 = vmatpush1.bf16.msra.mxu0 0
    %866 = vmatprep.subr.bf16.mxu0 0
    %867 = vmatpush1.bf16.msra.mxu0 0
    %868 = vmatprep.mubr.bf16.mxu0 0
    %869 = vmatmul.mubr.bf16.gmra.mrb[0].mxu0 %v44
    %v870 = vpop.f32.mrb[0].mxu0
    %v871 = vadd.f32 %v30, %v870
    %v872 = vpop.f32.mrb[0].mxu0
    %v873 = vpop.f32.mrb[0].mxu0
    %v874 = vadd.f32 %v35, %v873
    %v875 = vpop.f32.mrb[0].mxu0
    %876 = vdwg.mxu0
    %v877 = vmax.f32 %v871, 0.0
    %v878 = vmax.f32 %v874, 0.0
    %v879 = vpack.c.bf16 %v878, %v877
    %880 = vmatprep.subr.bf16.mxu0 0
    %881 = vmatpush1.bf16.msra.mxu0 %v879
    %882 = vmatprep.subr.bf16.mxu0 0
    %883 = vmatpush1.bf16.msra.mxu0 0
    %884 = vmatprep.subr.bf16.mxu0 0
    %885 = vmatpush1.bf16.msra.mxu0 0
    %886 = vmatprep.subr.bf16.mxu0 0
    %887 = vmatpush1.bf16.msra.mxu0 0
    %888 = vmatprep.subr.bf16.mxu0 0
    %889 = vmatpush1.bf16.msra.mxu0 0
    %890 = vmatprep.subr.bf16.mxu0 0
    %891 = vmatpush1.bf16.msra.mxu0 0
    %892 = vmatprep.subr.bf16.mxu0 0
    %893 = vmatpush1.bf16.msra.mxu0 0
    %894 = vmatprep.subr.bf16.mxu0 0
    %895 = vmatpush1.bf16.msra.mxu0 0
    %896 = vmatprep.subr.bf16.mxu0 0
    %897 = vmatpush1.bf16.msra.mxu0 0
    %898 = vmatprep.subr.bf16.mxu0 0
    %899 = vmatpush1.bf16.msra.mxu0 0
    %900 = vmatprep.subr.bf16.mxu0 0
    %901 = vmatpush1.bf16.msra.mxu0 0
    %902 = vmatprep.subr.bf16.mxu0 0
    %903 = vmatpush1.bf16.msra.mxu0 0
    %904 = vmatprep.subr.bf16.mxu0 0
    %905 = vmatpush1.bf16.msra.mxu0 0
    %906 = vmatprep.subr.bf16.mxu0 0
    %907 = vmatpush1.bf16.msra.mxu0 0
    %908 = vmatprep.subr.bf16.mxu0 0
    %909 = vmatpush1.bf16.msra.mxu0 0
    %910 = vmatprep.subr.bf16.mxu0 0
    %911 = vmatpush1.bf16.msra.mxu0 0
    %912 = vmatprep.mubr.bf16.mxu0 0
    %913 = vmatmul.mubr.bf16.gmra.mrb[0].mxu0 %v137
    %v914 = vpop.f32.mrb[0].mxu0
    %v915 = vadd.f32 %v108, %v914
    %v916 = vpop.f32.mrb[0].mxu0
    %v917 = vpop.f32.mrb[0].mxu0
    %v918 = vadd.f32 %v113, %v917
    %v919 = vpop.f32.mrb[0].mxu0
    %920 = vmatprep.mubr.bf16.mxu0 0
    %921 = vmatmul.mubr.bf16.gmra.mrb[0].mxu0 %v140
    %v922 = vpop.f32.mrb[0].mxu0
    %v923 = vadd.f32 %v118, %v922
    %v924 = vpop.f32.mrb[0].mxu0
    %v925 = vpop.f32.mrb[0].mxu0
    %v926 = vadd.f32 %v123, %v925
    %v927 = vpop.f32.mrb[0].mxu0
    %928 = vdwg.mxu0
    %v929 = vmax.f32 %v915, 0.0
    %v930 = vmax.f32 %v918, 0.0
    %v931 = vmax.f32 %v923, 0.0
    %v932 = vmax.f32 %v926, 0.0
    %v933 = vmax.f32 %v827, %v929
    %v934 = vmax.f32 %v828, %v930
    %v935 = vmax.f32 %v829, %v931
    %v936 = vmax.f32 %v830, %v932
    %p937 = scmp.eq.s32.totalorder 0, 0
    // Predicated region
    $region22: #{tpu_custom_call.1} parent=1 // pred_check
      %p938 = pneg %p937
    $region23: #{tpu_custom_call.1} parent=1 // pred_check_branch
      %940 = sbr.rel (%p938) target = $region25
    $region24: #{tpu_custom_call.1} parent=1 // pred_region
      %vm941 = vcmask 261120
      %942 = vst.msk [vmem:[#allocation2] sm:$0xff] %vm941, %v933
      %943 = vst.msk [vmem:[#allocation2 + $0x8] sm:$0xff] %vm941, %v934
      %944 = vst.msk [vmem:[#allocation2 + $0x10] sm:$0xff] %vm941, %v935
      %945 = vst.msk [vmem:[#allocation2 + $0x18] sm:$0xff] %vm941, %v936
    $region25: #{tpu_custom_call.1} parent=1 // pred_fallthru
      _
    %p946 = scmp.gt.s32.totalorder 0, 0
    // Predicated region
    $region26: #{tpu_custom_call.1} parent=1 // pred_check
      %p947 = pneg %p946
    $region27: #{tpu_custom_call.1} parent=1 // pred_check_branch
      %949 = sbr.rel (%p947) target = $region29
    $region28: #{tpu_custom_call.1} parent=1 // pred_region
      %v950 = vld [vmem:[#allocation2] sm:$0xff]
      %v951 = vld [vmem:[#allocation2 + $0x8] sm:$0xff]
      %v952 = vld [vmem:[#allocation2 + $0x10] sm:$0xff]
      %v953 = vld [vmem:[#allocation2 + $0x18] sm:$0xff]
      %v954 = vmax.f32 %v950, %v933
      %v955 = vmax.f32 %v951, %v934
      %v956 = vmax.f32 %v952, %v935
      %v957 = vmax.f32 %v953, %v936
      %vm958 = vcmask 261120
      %959 = vst.msk [vmem:[#allocation2] sm:$0xff] %vm958, %v954
      %960 = vst.msk [vmem:[#allocation2 + $0x8] sm:$0xff] %vm958, %v955
      %961 = vst.msk [vmem:[#allocation2 + $0x10] sm:$0xff] %vm958, %v956
      %962 = vst.msk [vmem:[#allocation2 + $0x18] sm:$0xff] %vm958, %v957
    $region29: #{tpu_custom_call.1} parent=1 // pred_fallthru
      _
    // Predicated region
    $region30: #{tpu_custom_call.1} parent=1 // pred_check
      _
    $region31: #{tpu_custom_call.1} parent=1 // pred_check_branch
      %964 = sbr.rel (0) target = $region33
    $region32: #{tpu_custom_call.1} parent=1 // pred_region
      %s966 = ssub.s32 512, 512
      %967 = vsyncadd [#allocation3], %s966
      %s968 = sshll.u32 [#allocation2], 4
      %s969 = int_to_ptr.vmem [resolvable:$true] %s968
      %974 = dma.vmem_to_hbm [thread:$0]  %s969, 512, %s5, [#allocation3], 128, 128, 8
    $region33: #{tpu_custom_call.1} parent=1 // pred_fallthru
      _
    // Predicated region
    $region34: #{tpu_custom_call.1} parent=1 // pred_check
      _
    $region35: #{tpu_custom_call.1} parent=1 // pred_check_branch
      %976 = sbr.rel (0) target = $region37
    $region36: #{tpu_custom_call.1} parent=1 // pred_region
      %977 = dma.done [#allocation3], 512
    $region37: #{tpu_custom_call.1} parent=1 // pred_fallthru
      _
    %978 = vsyncpa [#allocation3], 1

</llo_original>
